<compile_context>
chip_gen: v5e
topology: v5e:2x2
jax: 0.10.0
libtpu: 0.0.40
codegen_flags: <defaults>
</compile_context>

<pallas_src>
import jax
import jax.numpy as jnp
from jax.experimental import pallas as pl
from jax.experimental.pallas import tpu as pltpu


def lstm_model_kernel(x_ref, w1_ref, b1_ref,
                      wih0_ref, b0_ref,
                      wtop_ref, whh1_ref, b1sum_ref,
                      wf_ref, bf_ref, out_ref):
    # x_ref:    (T, Bp)  time-major, batch padded, I==1 squeezed (lane-dense rows)
    # w1_ref:   (1, H)   input projection weight (input_size == 1), b1_ref: (1, H)
    # wih0_ref: (H, 4H)  layer-0 input->hidden, g-columns pre-scaled by 2
    # b0_ref:   (1, 4H)  bih0 + bhh0, g-columns pre-scaled by 2
    # wtop_ref: (H, 8H)  [whh0^T | wih1^T], g-columns pre-scaled by 2
    # whh1_ref: (H, 4H)  layer-1 hidden->hidden, g-columns pre-scaled by 2
    # b1sum_ref:(1, 4H)  bih1 + bhh1, g-columns pre-scaled by 2
    # wf_ref:   (1, 2H)  last output row of linear_final weight, bf_ref: (1, 1)
    x = x_ref[...]
    T, Bp = x.shape
    H = w1_ref.shape[1]
    H4 = 4 * H

    # ---- input projection + ReLU (nn.Linear(1,H) + nn.ReLU) as a VPU broadcast ----
    xp = jnp.maximum(x[:, :, None] * w1_ref[...] + b1_ref[...], 0.0)      # (T, Bp, H)

    # Layer-0 input->hidden gates for ALL timesteps in one matmul; both layer-0
    # biases folded in (g-gate columns already pre-scaled by 2 in the wrapper).
    gih0 = (jnp.dot(xp.reshape(T * Bp, H), wih0_ref[...],
                    preferred_element_type=jnp.float32)
            + b0_ref[...]).reshape(T, Bp, H4)

    wtop = wtop_ref[...]                                   # (H, 8H)
    whh1 = whh1_ref[...]                                   # (H, 4H)
    b1sum = jnp.broadcast_to(b1sum_ref[...], (Bp, H4))     # hoisted, broadcast once

    def cell(gates, c):
        # PyTorch gate order i, f, g, o.  The g-columns of `gates` hold 2*ag, so a
        # single sigmoid pass yields everything: tanh(ag) = 2*sigmoid(2*ag) - 1.
        sg = jax.nn.sigmoid(gates)
        i = sg[:, 0 * H:1 * H]
        f = sg[:, 1 * H:2 * H]
        g = 2.0 * sg[:, 2 * H:3 * H] - 1.0
        o = sg[:, 3 * H:4 * H]
        c_new = f * c + i * g
        h_new = o * jnp.tanh(c_new)
        return h_new, c_new

    zeros_h = jnp.zeros((Bp, H), jnp.float32)
    h0, h1, c0, c1 = zeros_h, zeros_h, zeros_h, zeros_h
    r0 = jnp.zeros((Bp, H4), jnp.float32)       # h0(-1) @ whh0 == 0
    r1 = jnp.zeros((Bp, H4), jnp.float32)       # h1(-1) @ whh1 == 0

    # Fully unrolled serial recurrence.  Critical chain per step:
    #   g0 -> cell0 -> h0 @ wtop -> cell1 ; the h1 @ whh1 partial (r1) for the NEXT
    #   step is issued right after cell1 and sits off the critical path.
    for t in range(T):
        g0 = gih0[t] + r0
        h0, c0 = cell(g0, c0)
        top = jnp.dot(h0, wtop, preferred_element_type=jnp.float32)       # (Bp, 8H)
        r0 = top[:, :H4]                        # layer-0 recurrent gates for step t+1
        g1 = top[:, H4:] + r1 + b1sum           # layer-1 gates for step t
        h1, c1 = cell(g1, c1)
        r1 = jnp.dot(h1, whh1, preferred_element_type=jnp.float32)        # off chain

    # hidden.permute(1,0,2).reshape(B,-1) == [h_layer0 | h_layer1]; only the last
    # output column of linear_final survives prediction[:, -1], so a VPU multiply +
    # lane reduction replaces the degenerate (Bp,2H)x(2H,1) MXU dot.
    # TODO(synk): nn.Dropout is identity in eval mode; training-mode random mask omitted.
    wf = wf_ref[...]                                                     # (1, 2H)
    out = jnp.sum(h0 * wf[:, :H] + h1 * wf[:, H:], axis=1, keepdims=True) + bf_ref[...]
    out_ref[...] = out


def _scale_g_cols(w, H):
    # w: (..., 4H) gate-producing weight/bias in PyTorch i,f,g,o order.
    # Scale the g block by 2 so the kernel needs only sigmoid (tanh(x)=2*sig(2x)-1).
    return jnp.concatenate(
        [w[..., :2 * H], 2.0 * w[..., 2 * H:3 * H], w[..., 3 * H:]], axis=-1)


def prepare_params(params):
    """One-time weight preparation (hoisted out of the per-call path)."""
    H, I = params["w1"].shape
    assert I == 1, "kernel specialized for input_size=1 (module default)"
    H4 = 4 * H
    whh0T = _scale_g_cols(jnp.asarray(params["whh0"]).T, H)           # (H, 4H)
    wih1T = _scale_g_cols(jnp.asarray(params["wih1"]).T, H)           # (H, 4H)
    whh1T = _scale_g_cols(jnp.asarray(params["whh1"]).T, H)           # (H, 4H)
    prepped = {
        "w1":     jnp.asarray(params["w1"]).T.reshape(1, H),
        "b1":     jnp.asarray(params["b1"]).reshape(1, H),
        "wih0":   _scale_g_cols(jnp.asarray(params["wih0"]).T, H),    # (H, 4H)
        "b0":     _scale_g_cols(
            (params["bih0"] + params["bhh0"]).reshape(1, H4), H),
        "wtop":   jnp.concatenate([whh0T, wih1T], axis=1),            # (H, 8H)
        "whh1":   whh1T,
        "b1sum":  _scale_g_cols(
            (params["bih1"] + params["bhh1"]).reshape(1, H4), H),
        "wf_last": jnp.asarray(params["wf"])[-1].reshape(1, 2 * H),   # only col -1 used
        "bf_last": jnp.asarray(params["bf"])[-1].reshape(1, 1),
    }
    return {k: jnp.asarray(v, jnp.float32) for k, v in prepped.items()}


@jax.jit
def lstm_model_forward(x, prepped):
    """x: (B, T, 1) float32, batch_first like the PyTorch module. Returns (B,)."""
    B, T, I = x.shape
    assert I == 1, "kernel specialized for input_size=1 (module default)"
    Bp = ((B + 7) // 8) * 8

    # time-major, squeeze the degenerate feature axis, pad batch to sublane width
    xt = jnp.transpose(x[..., 0], (1, 0))                   # (T, B)
    if Bp != B:
        xt = jnp.pad(xt, ((0, 0), (0, Bp - B)))

    vmem = pl.BlockSpec(memory_space=pltpu.MemorySpace.VMEM)
    args = [xt,
            prepped["w1"], prepped["b1"],
            prepped["wih0"], prepped["b0"],
            prepped["wtop"], prepped["whh1"], prepped["b1sum"],
            prepped["wf_last"], prepped["bf_last"]]
    out = pl.pallas_call(
        lstm_model_kernel,
        out_shape=jax.ShapeDtypeStruct((Bp, 1), jnp.float32),
        in_specs=[vmem] * len(args),
        out_specs=vmem,
    )(*args)
    return out[:B, 0]                                        # prediction[:, -1] -> (B,)


def init_params(key, input_size=1, hidden=32, num_layers=2, output_size=1):
    assert num_layers == 2
    ks = jax.random.split(key, 8)
    H, I, O = hidden, input_size, output_size
    scale = 0.1
    return {
        "w1":   scale * jax.random.normal(ks[0], (H, I), jnp.float32),
        "b1":   scale * jax.random.normal(ks[1], (H,), jnp.float32),
        # LSTM weights (kaiming/orthogonal in torch; deterministic gaussian here),
        # LSTM biases zero exactly as in Model.init_weights.
        "wih0": scale * jax.random.normal(ks[2], (4 * H, H), jnp.float32),
        "whh0": scale * jax.random.normal(ks[3], (4 * H, H), jnp.float32),
        "bih0": jnp.zeros((4 * H,), jnp.float32),
        "bhh0": jnp.zeros((4 * H,), jnp.float32),
        "wih1": scale * jax.random.normal(ks[4], (4 * H, H), jnp.float32),
        "whh1": scale * jax.random.normal(ks[5], (4 * H, H), jnp.float32),
        "bih1": jnp.zeros((4 * H,), jnp.float32),
        "bhh1": jnp.zeros((4 * H,), jnp.float32),
        "wf":   scale * jax.random.normal(ks[6], (O, num_layers * H), jnp.float32),
        "bf":   scale * jax.random.normal(ks[7], (O,), jnp.float32),
    }


if __name__ == "__main__":
    key = jax.random.PRNGKey(0)
    k_p, k_x = jax.random.split(key)

    B, T, I = 4, 8, 1          # small shapes consistent with the module (input_size=1)
    params = init_params(k_p, input_size=I, hidden=32, num_layers=2, output_size=1)
    prepped = prepare_params(params)        # one-time weight prep, outside the call path
    x = jax.random.normal(k_x, (B, T, I), jnp.float32)

    y = lstm_model_forward(x, prepped)
    jax.block_until_ready(y)
    assert y.shape == (B,)
    print("KERNEL_OK")
</pallas_src>

<mosaic_0001>
module attributes {stable_mosaic.version = 11 : i64} {
  func.func @lstm_model_kernel(%arg0: memref<8x8xf32, #tpu.memory_space<vmem>>, %arg1: memref<1x32xf32, #tpu.memory_space<vmem>>, %arg2: memref<1x32xf32, #tpu.memory_space<vmem>>, %arg3: memref<32x128xf32, #tpu.memory_space<vmem>>, %arg4: memref<1x128xf32, #tpu.memory_space<vmem>>, %arg5: memref<32x256xf32, #tpu.memory_space<vmem>>, %arg6: memref<32x128xf32, #tpu.memory_space<vmem>>, %arg7: memref<1x128xf32, #tpu.memory_space<vmem>>, %arg8: memref<1x64xf32, #tpu.memory_space<vmem>>, %arg9: memref<1x1xf32, #tpu.memory_space<vmem>>, %arg10: memref<8x1xf32, #tpu.memory_space<vmem>>) attributes {dimension_semantics = [], scalar_prefetch = 0 : i64, scratch_operands = 0 : i64, tpu.core_type = #tpu.core_type<tc>} {
    %c0 = arith.constant 0 : index
    %c0_0 = arith.constant 0 : index
    %0 = vector.load %arg0[%c0, %c0_0] : memref<8x8xf32, #tpu.memory_space<vmem>>, vector<8x8xf32>
    %1 = vector.shape_cast %0 : vector<8x8xf32> to vector<8x8x1xf32>
    %c0_1 = arith.constant 0 : index
    %c0_2 = arith.constant 0 : index
    %2 = vector.load %arg1[%c0_1, %c0_2] : memref<1x32xf32, #tpu.memory_space<vmem>>, vector<1x32xf32>
    %3 = vector.shape_cast %2 : vector<1x32xf32> to vector<1x1x32xf32>
    %4 = vector.broadcast %1 : vector<8x8x1xf32> to vector<8x8x32xf32>
    %5 = vector.broadcast %3 : vector<1x1x32xf32> to vector<8x8x32xf32>
    %6 = arith.mulf %4, %5 : vector<8x8x32xf32>
    %c0_3 = arith.constant 0 : index
    %c0_4 = arith.constant 0 : index
    %7 = vector.load %arg2[%c0_3, %c0_4] : memref<1x32xf32, #tpu.memory_space<vmem>>, vector<1x32xf32>
    %8 = vector.shape_cast %7 : vector<1x32xf32> to vector<1x1x32xf32>
    %9 = vector.broadcast %8 : vector<1x1x32xf32> to vector<8x8x32xf32>
    %10 = arith.addf %6, %9 : vector<8x8x32xf32>
    %cst = arith.constant 0.000000e+00 : f32
    %11 = vector.broadcast %cst : f32 to vector<8x8x32xf32>
    %12 = arith.maximumf %10, %11 : vector<8x8x32xf32>
    %13 = vector.shape_cast %12 : vector<8x8x32xf32> to vector<64x32xf32>
    %c0_5 = arith.constant 0 : index
    %c0_6 = arith.constant 0 : index
    %14 = vector.load %arg3[%c0_5, %c0_6] : memref<32x128xf32, #tpu.memory_space<vmem>>, vector<32x128xf32>
    %cst_7 = arith.constant dense<0.000000e+00> : vector<64x128xf32>
    %15 = tpu.matmul %13, %14, %cst_7 {dimension_numbers = #tpu.dot_dimension_numbers<[1], [0], [0], [1], [0, 0, 1, 1], [], []>} : vector<64x32xf32>, vector<32x128xf32>, vector<64x128xf32> -> vector<64x128xf32>
    %c0_8 = arith.constant 0 : index
    %c0_9 = arith.constant 0 : index
    %16 = vector.load %arg4[%c0_8, %c0_9] : memref<1x128xf32, #tpu.memory_space<vmem>>, vector<1x128xf32>
    %17 = vector.broadcast %16 : vector<1x128xf32> to vector<64x128xf32>
    %18 = arith.addf %15, %17 : vector<64x128xf32>
    %19 = vector.shape_cast %18 : vector<64x128xf32> to vector<8x8x128xf32>
    %c0_10 = arith.constant 0 : index
    %c0_11 = arith.constant 0 : index
    %20 = vector.load %arg5[%c0_10, %c0_11] : memref<32x256xf32, #tpu.memory_space<vmem>>, vector<32x256xf32>
    %c0_12 = arith.constant 0 : index
    %c0_13 = arith.constant 0 : index
    %21 = vector.load %arg6[%c0_12, %c0_13] : memref<32x128xf32, #tpu.memory_space<vmem>>, vector<32x128xf32>
    %c0_14 = arith.constant 0 : index
    %c0_15 = arith.constant 0 : index
    %22 = vector.load %arg7[%c0_14, %c0_15] : memref<1x128xf32, #tpu.memory_space<vmem>>, vector<1x128xf32>
    %23 = vector.shape_cast %22 : vector<1x128xf32> to vector<1x128xf32>
    %24 = vector.broadcast %23 : vector<1x128xf32> to vector<8x128xf32>
    %cst_16 = arith.constant 0.000000e+00 : f32
    %25 = vector.broadcast %cst_16 : f32 to vector<8x32xf32>
    %cst_17 = arith.constant 0.000000e+00 : f32
    %26 = vector.broadcast %cst_17 : f32 to vector<8x128xf32>
    %cst_18 = arith.constant 0.000000e+00 : f32
    %27 = vector.broadcast %cst_18 : f32 to vector<8x128xf32>
    %28 = vector.extract_strided_slice %19 {offsets = [0, 0, 0], sizes = [1, 8, 128], strides = [1, 1, 1]} : vector<8x8x128xf32> to vector<1x8x128xf32>
    %29 = vector.shape_cast %28 : vector<1x8x128xf32> to vector<8x128xf32>
    %30 = arith.addf %29, %26 : vector<8x128xf32>
    %31 = arith.negf %30 : vector<8x128xf32>
    %32 = math.exp %31 : vector<8x128xf32>
    %cst_19 = arith.constant 1.000000e+00 : f32
    %33 = vector.broadcast %cst_19 : f32 to vector<8x128xf32>
    %34 = arith.addf %33, %32 : vector<8x128xf32>
    %35 = arith.divf %33, %34 : vector<8x128xf32>
    %36 = vector.extract_strided_slice %35 {offsets = [0, 0], sizes = [8, 32], strides = [1, 1]} : vector<8x128xf32> to vector<8x32xf32>
    %37 = vector.extract_strided_slice %35 {offsets = [0, 32], sizes = [8, 32], strides = [1, 1]} : vector<8x128xf32> to vector<8x32xf32>
    %38 = vector.extract_strided_slice %35 {offsets = [0, 64], sizes = [8, 32], strides = [1, 1]} : vector<8x128xf32> to vector<8x32xf32>
    %cst_20 = arith.constant 2.000000e+00 : f32
    %39 = vector.broadcast %cst_20 : f32 to vector<8x32xf32>
    %40 = arith.mulf %39, %38 : vector<8x32xf32>
    %cst_21 = arith.constant 1.000000e+00 : f32
    %41 = vector.broadcast %cst_21 : f32 to vector<8x32xf32>
    %42 = arith.subf %40, %41 : vector<8x32xf32>
    %43 = vector.extract_strided_slice %35 {offsets = [0, 96], sizes = [8, 32], strides = [1, 1]} : vector<8x128xf32> to vector<8x32xf32>
    %44 = arith.mulf %37, %25 : vector<8x32xf32>
    %45 = arith.mulf %36, %42 : vector<8x32xf32>
    %46 = arith.addf %44, %45 : vector<8x32xf32>
    %47 = math.tanh %46 : vector<8x32xf32>
    %48 = arith.mulf %43, %47 : vector<8x32xf32>
    %cst_22 = arith.constant dense<0.000000e+00> : vector<8x256xf32>
    %49 = tpu.matmul %48, %20, %cst_22 {dimension_numbers = #tpu.dot_dimension_numbers<[1], [0], [0], [1], [0, 0, 1, 1], [], []>} : vector<8x32xf32>, vector<32x256xf32>, vector<8x256xf32> -> vector<8x256xf32>
    %50 = vector.extract_strided_slice %49 {offsets = [0, 0], sizes = [8, 128], strides = [1, 1]} : vector<8x256xf32> to vector<8x128xf32>
    %51 = vector.extract_strided_slice %49 {offsets = [0, 128], sizes = [8, 128], strides = [1, 1]} : vector<8x256xf32> to vector<8x128xf32>
    %52 = arith.addf %51, %27 : vector<8x128xf32>
    %53 = arith.addf %52, %24 : vector<8x128xf32>
    %54 = arith.negf %53 : vector<8x128xf32>
    %55 = math.exp %54 : vector<8x128xf32>
    %cst_23 = arith.constant 1.000000e+00 : f32
    %56 = vector.broadcast %cst_23 : f32 to vector<8x128xf32>
    %57 = arith.addf %56, %55 : vector<8x128xf32>
    %58 = arith.divf %56, %57 : vector<8x128xf32>
    %59 = vector.extract_strided_slice %58 {offsets = [0, 0], sizes = [8, 32], strides = [1, 1]} : vector<8x128xf32> to vector<8x32xf32>
    %60 = vector.extract_strided_slice %58 {offsets = [0, 32], sizes = [8, 32], strides = [1, 1]} : vector<8x128xf32> to vector<8x32xf32>
    %61 = vector.extract_strided_slice %58 {offsets = [0, 64], sizes = [8, 32], strides = [1, 1]} : vector<8x128xf32> to vector<8x32xf32>
    %cst_24 = arith.constant 2.000000e+00 : f32
    %62 = vector.broadcast %cst_24 : f32 to vector<8x32xf32>
    %63 = arith.mulf %62, %61 : vector<8x32xf32>
    %cst_25 = arith.constant 1.000000e+00 : f32
    %64 = vector.broadcast %cst_25 : f32 to vector<8x32xf32>
    %65 = arith.subf %63, %64 : vector<8x32xf32>
    %66 = vector.extract_strided_slice %58 {offsets = [0, 96], sizes = [8, 32], strides = [1, 1]} : vector<8x128xf32> to vector<8x32xf32>
    %67 = arith.mulf %60, %25 : vector<8x32xf32>
    %68 = arith.mulf %59, %65 : vector<8x32xf32>
    %69 = arith.addf %67, %68 : vector<8x32xf32>
    %70 = math.tanh %69 : vector<8x32xf32>
    %71 = arith.mulf %66, %70 : vector<8x32xf32>
    %cst_26 = arith.constant dense<0.000000e+00> : vector<8x128xf32>
    %72 = tpu.matmul %71, %21, %cst_26 {dimension_numbers = #tpu.dot_dimension_numbers<[1], [0], [0], [1], [0, 0, 1, 1], [], []>} : vector<8x32xf32>, vector<32x128xf32>, vector<8x128xf32> -> vector<8x128xf32>
    %73 = vector.extract_strided_slice %19 {offsets = [1, 0, 0], sizes = [1, 8, 128], strides = [1, 1, 1]} : vector<8x8x128xf32> to vector<1x8x128xf32>
    %74 = vector.shape_cast %73 : vector<1x8x128xf32> to vector<8x128xf32>
    %75 = arith.addf %74, %50 : vector<8x128xf32>
    %76 = arith.negf %75 : vector<8x128xf32>
    %77 = math.exp %76 : vector<8x128xf32>
    %cst_27 = arith.constant 1.000000e+00 : f32
    %78 = vector.broadcast %cst_27 : f32 to vector<8x128xf32>
    %79 = arith.addf %78, %77 : vector<8x128xf32>
    %80 = arith.divf %78, %79 : vector<8x128xf32>
    %81 = vector.extract_strided_slice %80 {offsets = [0, 0], sizes = [8, 32], strides = [1, 1]} : vector<8x128xf32> to vector<8x32xf32>
    %82 = vector.extract_strided_slice %80 {offsets = [0, 32], sizes = [8, 32], strides = [1, 1]} : vector<8x128xf32> to vector<8x32xf32>
    %83 = vector.extract_strided_slice %80 {offsets = [0, 64], sizes = [8, 32], strides = [1, 1]} : vector<8x128xf32> to vector<8x32xf32>
    %cst_28 = arith.constant 2.000000e+00 : f32
    %84 = vector.broadcast %cst_28 : f32 to vector<8x32xf32>
    %85 = arith.mulf %84, %83 : vector<8x32xf32>
    %cst_29 = arith.constant 1.000000e+00 : f32
    %86 = vector.broadcast %cst_29 : f32 to vector<8x32xf32>
    %87 = arith.subf %85, %86 : vector<8x32xf32>
    %88 = vector.extract_strided_slice %80 {offsets = [0, 96], sizes = [8, 32], strides = [1, 1]} : vector<8x128xf32> to vector<8x32xf32>
    %89 = arith.mulf %82, %46 : vector<8x32xf32>
    %90 = arith.mulf %81, %87 : vector<8x32xf32>
    %91 = arith.addf %89, %90 : vector<8x32xf32>
    %92 = math.tanh %91 : vector<8x32xf32>
    %93 = arith.mulf %88, %92 : vector<8x32xf32>
    %cst_30 = arith.constant dense<0.000000e+00> : vector<8x256xf32>
    %94 = tpu.matmul %93, %20, %cst_30 {dimension_numbers = #tpu.dot_dimension_numbers<[1], [0], [0], [1], [0, 0, 1, 1], [], []>} : vector<8x32xf32>, vector<32x256xf32>, vector<8x256xf32> -> vector<8x256xf32>
    %95 = vector.extract_strided_slice %94 {offsets = [0, 0], sizes = [8, 128], strides = [1, 1]} : vector<8x256xf32> to vector<8x128xf32>
    %96 = vector.extract_strided_slice %94 {offsets = [0, 128], sizes = [8, 128], strides = [1, 1]} : vector<8x256xf32> to vector<8x128xf32>
    %97 = arith.addf %96, %72 : vector<8x128xf32>
    %98 = arith.addf %97, %24 : vector<8x128xf32>
    %99 = arith.negf %98 : vector<8x128xf32>
    %100 = math.exp %99 : vector<8x128xf32>
    %cst_31 = arith.constant 1.000000e+00 : f32
    %101 = vector.broadcast %cst_31 : f32 to vector<8x128xf32>
    %102 = arith.addf %101, %100 : vector<8x128xf32>
    %103 = arith.divf %101, %102 : vector<8x128xf32>
    %104 = vector.extract_strided_slice %103 {offsets = [0, 0], sizes = [8, 32], strides = [1, 1]} : vector<8x128xf32> to vector<8x32xf32>
    %105 = vector.extract_strided_slice %103 {offsets = [0, 32], sizes = [8, 32], strides = [1, 1]} : vector<8x128xf32> to vector<8x32xf32>
    %106 = vector.extract_strided_slice %103 {offsets = [0, 64], sizes = [8, 32], strides = [1, 1]} : vector<8x128xf32> to vector<8x32xf32>
    %cst_32 = arith.constant 2.000000e+00 : f32
    %107 = vector.broadcast %cst_32 : f32 to vector<8x32xf32>
    %108 = arith.mulf %107, %106 : vector<8x32xf32>
    %cst_33 = arith.constant 1.000000e+00 : f32
    %109 = vector.broadcast %cst_33 : f32 to vector<8x32xf32>
    %110 = arith.subf %108, %109 : vector<8x32xf32>
    %111 = vector.extract_strided_slice %103 {offsets = [0, 96], sizes = [8, 32], strides = [1, 1]} : vector<8x128xf32> to vector<8x32xf32>
    %112 = arith.mulf %105, %69 : vector<8x32xf32>
    %113 = arith.mulf %104, %110 : vector<8x32xf32>
    %114 = arith.addf %112, %113 : vector<8x32xf32>
    %115 = math.tanh %114 : vector<8x32xf32>
    %116 = arith.mulf %111, %115 : vector<8x32xf32>
    %cst_34 = arith.constant dense<0.000000e+00> : vector<8x128xf32>
    %117 = tpu.matmul %116, %21, %cst_34 {dimension_numbers = #tpu.dot_dimension_numbers<[1], [0], [0], [1], [0, 0, 1, 1], [], []>} : vector<8x32xf32>, vector<32x128xf32>, vector<8x128xf32> -> vector<8x128xf32>
    %118 = vector.extract_strided_slice %19 {offsets = [2, 0, 0], sizes = [1, 8, 128], strides = [1, 1, 1]} : vector<8x8x128xf32> to vector<1x8x128xf32>
    %119 = vector.shape_cast %118 : vector<1x8x128xf32> to vector<8x128xf32>
    %120 = arith.addf %119, %95 : vector<8x128xf32>
    %121 = arith.negf %120 : vector<8x128xf32>
    %122 = math.exp %121 : vector<8x128xf32>
    %cst_35 = arith.constant 1.000000e+00 : f32
    %123 = vector.broadcast %cst_35 : f32 to vector<8x128xf32>
    %124 = arith.addf %123, %122 : vector<8x128xf32>
    %125 = arith.divf %123, %124 : vector<8x128xf32>
    %126 = vector.extract_strided_slice %125 {offsets = [0, 0], sizes = [8, 32], strides = [1, 1]} : vector<8x128xf32> to vector<8x32xf32>
    %127 = vector.extract_strided_slice %125 {offsets = [0, 32], sizes = [8, 32], strides = [1, 1]} : vector<8x128xf32> to vector<8x32xf32>
    %128 = vector.extract_strided_slice %125 {offsets = [0, 64], sizes = [8, 32], strides = [1, 1]} : vector<8x128xf32> to vector<8x32xf32>
    %cst_36 = arith.constant 2.000000e+00 : f32
    %129 = vector.broadcast %cst_36 : f32 to vector<8x32xf32>
    %130 = arith.mulf %129, %128 : vector<8x32xf32>
    %cst_37 = arith.constant 1.000000e+00 : f32
    %131 = vector.broadcast %cst_37 : f32 to vector<8x32xf32>
    %132 = arith.subf %130, %131 : vector<8x32xf32>
    %133 = vector.extract_strided_slice %125 {offsets = [0, 96], sizes = [8, 32], strides = [1, 1]} : vector<8x128xf32> to vector<8x32xf32>
    %134 = arith.mulf %127, %91 : vector<8x32xf32>
    %135 = arith.mulf %126, %132 : vector<8x32xf32>
    %136 = arith.addf %134, %135 : vector<8x32xf32>
    %137 = math.tanh %136 : vector<8x32xf32>
    %138 = arith.mulf %133, %137 : vector<8x32xf32>
    %cst_38 = arith.constant dense<0.000000e+00> : vector<8x256xf32>
    %139 = tpu.matmul %138, %20, %cst_38 {dimension_numbers = #tpu.dot_dimension_numbers<[1], [0], [0], [1], [0, 0, 1, 1], [], []>} : vector<8x32xf32>, vector<32x256xf32>, vector<8x256xf32> -> vector<8x256xf32>
    %140 = vector.extract_strided_slice %139 {offsets = [0, 0], sizes = [8, 128], strides = [1, 1]} : vector<8x256xf32> to vector<8x128xf32>
    %141 = vector.extract_strided_slice %139 {offsets = [0, 128], sizes = [8, 128], strides = [1, 1]} : vector<8x256xf32> to vector<8x128xf32>
    %142 = arith.addf %141, %117 : vector<8x128xf32>
    %143 = arith.addf %142, %24 : vector<8x128xf32>
    %144 = arith.negf %143 : vector<8x128xf32>
    %145 = math.exp %144 : vector<8x128xf32>
    %cst_39 = arith.constant 1.000000e+00 : f32
    %146 = vector.broadcast %cst_39 : f32 to vector<8x128xf32>
    %147 = arith.addf %146, %145 : vector<8x128xf32>
    %148 = arith.divf %146, %147 : vector<8x128xf32>
    %149 = vector.extract_strided_slice %148 {offsets = [0, 0], sizes = [8, 32], strides = [1, 1]} : vector<8x128xf32> to vector<8x32xf32>
    %150 = vector.extract_strided_slice %148 {offsets = [0, 32], sizes = [8, 32], strides = [1, 1]} : vector<8x128xf32> to vector<8x32xf32>
    %151 = vector.extract_strided_slice %148 {offsets = [0, 64], sizes = [8, 32], strides = [1, 1]} : vector<8x128xf32> to vector<8x32xf32>
    %cst_40 = arith.constant 2.000000e+00 : f32
    %152 = vector.broadcast %cst_40 : f32 to vector<8x32xf32>
    %153 = arith.mulf %152, %151 : vector<8x32xf32>
    %cst_41 = arith.constant 1.000000e+00 : f32
    %154 = vector.broadcast %cst_41 : f32 to vector<8x32xf32>
    %155 = arith.subf %153, %154 : vector<8x32xf32>
    %156 = vector.extract_strided_slice %148 {offsets = [0, 96], sizes = [8, 32], strides = [1, 1]} : vector<8x128xf32> to vector<8x32xf32>
    %157 = arith.mulf %150, %114 : vector<8x32xf32>
    %158 = arith.mulf %149, %155 : vector<8x32xf32>
    %159 = arith.addf %157, %158 : vector<8x32xf32>
    %160 = math.tanh %159 : vector<8x32xf32>
    %161 = arith.mulf %156, %160 : vector<8x32xf32>
    %cst_42 = arith.constant dense<0.000000e+00> : vector<8x128xf32>
    %162 = tpu.matmul %161, %21, %cst_42 {dimension_numbers = #tpu.dot_dimension_numbers<[1], [0], [0], [1], [0, 0, 1, 1], [], []>} : vector<8x32xf32>, vector<32x128xf32>, vector<8x128xf32> -> vector<8x128xf32>
    %163 = vector.extract_strided_slice %19 {offsets = [3, 0, 0], sizes = [1, 8, 128], strides = [1, 1, 1]} : vector<8x8x128xf32> to vector<1x8x128xf32>
    %164 = vector.shape_cast %163 : vector<1x8x128xf32> to vector<8x128xf32>
    %165 = arith.addf %164, %140 : vector<8x128xf32>
    %166 = arith.negf %165 : vector<8x128xf32>
    %167 = math.exp %166 : vector<8x128xf32>
    %cst_43 = arith.constant 1.000000e+00 : f32
    %168 = vector.broadcast %cst_43 : f32 to vector<8x128xf32>
    %169 = arith.addf %168, %167 : vector<8x128xf32>
    %170 = arith.divf %168, %169 : vector<8x128xf32>
    %171 = vector.extract_strided_slice %170 {offsets = [0, 0], sizes = [8, 32], strides = [1, 1]} : vector<8x128xf32> to vector<8x32xf32>
    %172 = vector.extract_strided_slice %170 {offsets = [0, 32], sizes = [8, 32], strides = [1, 1]} : vector<8x128xf32> to vector<8x32xf32>
    %173 = vector.extract_strided_slice %170 {offsets = [0, 64], sizes = [8, 32], strides = [1, 1]} : vector<8x128xf32> to vector<8x32xf32>
    %cst_44 = arith.constant 2.000000e+00 : f32
    %174 = vector.broadcast %cst_44 : f32 to vector<8x32xf32>
    %175 = arith.mulf %174, %173 : vector<8x32xf32>
    %cst_45 = arith.constant 1.000000e+00 : f32
    %176 = vector.broadcast %cst_45 : f32 to vector<8x32xf32>
    %177 = arith.subf %175, %176 : vector<8x32xf32>
    %178 = vector.extract_strided_slice %170 {offsets = [0, 96], sizes = [8, 32], strides = [1, 1]} : vector<8x128xf32> to vector<8x32xf32>
    %179 = arith.mulf %172, %136 : vector<8x32xf32>
    %180 = arith.mulf %171, %177 : vector<8x32xf32>
    %181 = arith.addf %179, %180 : vector<8x32xf32>
    %182 = math.tanh %181 : vector<8x32xf32>
    %183 = arith.mulf %178, %182 : vector<8x32xf32>
    %cst_46 = arith.constant dense<0.000000e+00> : vector<8x256xf32>
    %184 = tpu.matmul %183, %20, %cst_46 {dimension_numbers = #tpu.dot_dimension_numbers<[1], [0], [0], [1], [0, 0, 1, 1], [], []>} : vector<8x32xf32>, vector<32x256xf32>, vector<8x256xf32> -> vector<8x256xf32>
    %185 = vector.extract_strided_slice %184 {offsets = [0, 0], sizes = [8, 128], strides = [1, 1]} : vector<8x256xf32> to vector<8x128xf32>
    %186 = vector.extract_strided_slice %184 {offsets = [0, 128], sizes = [8, 128], strides = [1, 1]} : vector<8x256xf32> to vector<8x128xf32>
    %187 = arith.addf %186, %162 : vector<8x128xf32>
    %188 = arith.addf %187, %24 : vector<8x128xf32>
    %189 = arith.negf %188 : vector<8x128xf32>
    %190 = math.exp %189 : vector<8x128xf32>
    %cst_47 = arith.constant 1.000000e+00 : f32
    %191 = vector.broadcast %cst_47 : f32 to vector<8x128xf32>
    %192 = arith.addf %191, %190 : vector<8x128xf32>
    %193 = arith.divf %191, %192 : vector<8x128xf32>
    %194 = vector.extract_strided_slice %193 {offsets = [0, 0], sizes = [8, 32], strides = [1, 1]} : vector<8x128xf32> to vector<8x32xf32>
    %195 = vector.extract_strided_slice %193 {offsets = [0, 32], sizes = [8, 32], strides = [1, 1]} : vector<8x128xf32> to vector<8x32xf32>
    %196 = vector.extract_strided_slice %193 {offsets = [0, 64], sizes = [8, 32], strides = [1, 1]} : vector<8x128xf32> to vector<8x32xf32>
    %cst_48 = arith.constant 2.000000e+00 : f32
    %197 = vector.broadcast %cst_48 : f32 to vector<8x32xf32>
    %198 = arith.mulf %197, %196 : vector<8x32xf32>
    %cst_49 = arith.constant 1.000000e+00 : f32
    %199 = vector.broadcast %cst_49 : f32 to vector<8x32xf32>
    %200 = arith.subf %198, %199 : vector<8x32xf32>
    %201 = vector.extract_strided_slice %193 {offsets = [0, 96], sizes = [8, 32], strides = [1, 1]} : vector<8x128xf32> to vector<8x32xf32>
    %202 = arith.mulf %195, %159 : vector<8x32xf32>
    %203 = arith.mulf %194, %200 : vector<8x32xf32>
    %204 = arith.addf %202, %203 : vector<8x32xf32>
    %205 = math.tanh %204 : vector<8x32xf32>
    %206 = arith.mulf %201, %205 : vector<8x32xf32>
    %cst_50 = arith.constant dense<0.000000e+00> : vector<8x128xf32>
    %207 = tpu.matmul %206, %21, %cst_50 {dimension_numbers = #tpu.dot_dimension_numbers<[1], [0], [0], [1], [0, 0, 1, 1], [], []>} : vector<8x32xf32>, vector<32x128xf32>, vector<8x128xf32> -> vector<8x128xf32>
    %208 = vector.extract_strided_slice %19 {offsets = [4, 0, 0], sizes = [1, 8, 128], strides = [1, 1, 1]} : vector<8x8x128xf32> to vector<1x8x128xf32>
    %209 = vector.shape_cast %208 : vector<1x8x128xf32> to vector<8x128xf32>
    %210 = arith.addf %209, %185 : vector<8x128xf32>
    %211 = arith.negf %210 : vector<8x128xf32>
    %212 = math.exp %211 : vector<8x128xf32>
    %cst_51 = arith.constant 1.000000e+00 : f32
    %213 = vector.broadcast %cst_51 : f32 to vector<8x128xf32>
    %214 = arith.addf %213, %212 : vector<8x128xf32>
    %215 = arith.divf %213, %214 : vector<8x128xf32>
    %216 = vector.extract_strided_slice %215 {offsets = [0, 0], sizes = [8, 32], strides = [1, 1]} : vector<8x128xf32> to vector<8x32xf32>
    %217 = vector.extract_strided_slice %215 {offsets = [0, 32], sizes = [8, 32], strides = [1, 1]} : vector<8x128xf32> to vector<8x32xf32>
    %218 = vector.extract_strided_slice %215 {offsets = [0, 64], sizes = [8, 32], strides = [1, 1]} : vector<8x128xf32> to vector<8x32xf32>
    %cst_52 = arith.constant 2.000000e+00 : f32
    %219 = vector.broadcast %cst_52 : f32 to vector<8x32xf32>
    %220 = arith.mulf %219, %218 : vector<8x32xf32>
    %cst_53 = arith.constant 1.000000e+00 : f32
    %221 = vector.broadcast %cst_53 : f32 to vector<8x32xf32>
    %222 = arith.subf %220, %221 : vector<8x32xf32>
    %223 = vector.extract_strided_slice %215 {offsets = [0, 96], sizes = [8, 32], strides = [1, 1]} : vector<8x128xf32> to vector<8x32xf32>
    %224 = arith.mulf %217, %181 : vector<8x32xf32>
    %225 = arith.mulf %216, %222 : vector<8x32xf32>
    %226 = arith.addf %224, %225 : vector<8x32xf32>
    %227 = math.tanh %226 : vector<8x32xf32>
    %228 = arith.mulf %223, %227 : vector<8x32xf32>
    %cst_54 = arith.constant dense<0.000000e+00> : vector<8x256xf32>
    %229 = tpu.matmul %228, %20, %cst_54 {dimension_numbers = #tpu.dot_dimension_numbers<[1], [0], [0], [1], [0, 0, 1, 1], [], []>} : vector<8x32xf32>, vector<32x256xf32>, vector<8x256xf32> -> vector<8x256xf32>
    %230 = vector.extract_strided_slice %229 {offsets = [0, 0], sizes = [8, 128], strides = [1, 1]} : vector<8x256xf32> to vector<8x128xf32>
    %231 = vector.extract_strided_slice %229 {offsets = [0, 128], sizes = [8, 128], strides = [1, 1]} : vector<8x256xf32> to vector<8x128xf32>
    %232 = arith.addf %231, %207 : vector<8x128xf32>
    %233 = arith.addf %232, %24 : vector<8x128xf32>
    %234 = arith.negf %233 : vector<8x128xf32>
    %235 = math.exp %234 : vector<8x128xf32>
    %cst_55 = arith.constant 1.000000e+00 : f32
    %236 = vector.broadcast %cst_55 : f32 to vector<8x128xf32>
    %237 = arith.addf %236, %235 : vector<8x128xf32>
    %238 = arith.divf %236, %237 : vector<8x128xf32>
    %239 = vector.extract_strided_slice %238 {offsets = [0, 0], sizes = [8, 32], strides = [1, 1]} : vector<8x128xf32> to vector<8x32xf32>
    %240 = vector.extract_strided_slice %238 {offsets = [0, 32], sizes = [8, 32], strides = [1, 1]} : vector<8x128xf32> to vector<8x32xf32>
    %241 = vector.extract_strided_slice %238 {offsets = [0, 64], sizes = [8, 32], strides = [1, 1]} : vector<8x128xf32> to vector<8x32xf32>
    %cst_56 = arith.constant 2.000000e+00 : f32
    %242 = vector.broadcast %cst_56 : f32 to vector<8x32xf32>
    %243 = arith.mulf %242, %241 : vector<8x32xf32>
    %cst_57 = arith.constant 1.000000e+00 : f32
    %244 = vector.broadcast %cst_57 : f32 to vector<8x32xf32>
    %245 = arith.subf %243, %244 : vector<8x32xf32>
    %246 = vector.extract_strided_slice %238 {offsets = [0, 96], sizes = [8, 32], strides = [1, 1]} : vector<8x128xf32> to vector<8x32xf32>
    %247 = arith.mulf %240, %204 : vector<8x32xf32>
    %248 = arith.mulf %239, %245 : vector<8x32xf32>
    %249 = arith.addf %247, %248 : vector<8x32xf32>
    %250 = math.tanh %249 : vector<8x32xf32>
    %251 = arith.mulf %246, %250 : vector<8x32xf32>
    %cst_58 = arith.constant dense<0.000000e+00> : vector<8x128xf32>
    %252 = tpu.matmul %251, %21, %cst_58 {dimension_numbers = #tpu.dot_dimension_numbers<[1], [0], [0], [1], [0, 0, 1, 1], [], []>} : vector<8x32xf32>, vector<32x128xf32>, vector<8x128xf32> -> vector<8x128xf32>
    %253 = vector.extract_strided_slice %19 {offsets = [5, 0, 0], sizes = [1, 8, 128], strides = [1, 1, 1]} : vector<8x8x128xf32> to vector<1x8x128xf32>
    %254 = vector.shape_cast %253 : vector<1x8x128xf32> to vector<8x128xf32>
    %255 = arith.addf %254, %230 : vector<8x128xf32>
    %256 = arith.negf %255 : vector<8x128xf32>
    %257 = math.exp %256 : vector<8x128xf32>
    %cst_59 = arith.constant 1.000000e+00 : f32
    %258 = vector.broadcast %cst_59 : f32 to vector<8x128xf32>
    %259 = arith.addf %258, %257 : vector<8x128xf32>
    %260 = arith.divf %258, %259 : vector<8x128xf32>
    %261 = vector.extract_strided_slice %260 {offsets = [0, 0], sizes = [8, 32], strides = [1, 1]} : vector<8x128xf32> to vector<8x32xf32>
    %262 = vector.extract_strided_slice %260 {offsets = [0, 32], sizes = [8, 32], strides = [1, 1]} : vector<8x128xf32> to vector<8x32xf32>
    %263 = vector.extract_strided_slice %260 {offsets = [0, 64], sizes = [8, 32], strides = [1, 1]} : vector<8x128xf32> to vector<8x32xf32>
    %cst_60 = arith.constant 2.000000e+00 : f32
    %264 = vector.broadcast %cst_60 : f32 to vector<8x32xf32>
    %265 = arith.mulf %264, %263 : vector<8x32xf32>
    %cst_61 = arith.constant 1.000000e+00 : f32
    %266 = vector.broadcast %cst_61 : f32 to vector<8x32xf32>
    %267 = arith.subf %265, %266 : vector<8x32xf32>
    %268 = vector.extract_strided_slice %260 {offsets = [0, 96], sizes = [8, 32], strides = [1, 1]} : vector<8x128xf32> to vector<8x32xf32>
    %269 = arith.mulf %262, %226 : vector<8x32xf32>
    %270 = arith.mulf %261, %267 : vector<8x32xf32>
    %271 = arith.addf %269, %270 : vector<8x32xf32>
    %272 = math.tanh %271 : vector<8x32xf32>
    %273 = arith.mulf %268, %272 : vector<8x32xf32>
    %cst_62 = arith.constant dense<0.000000e+00> : vector<8x256xf32>
    %274 = tpu.matmul %273, %20, %cst_62 {dimension_numbers = #tpu.dot_dimension_numbers<[1], [0], [0], [1], [0, 0, 1, 1], [], []>} : vector<8x32xf32>, vector<32x256xf32>, vector<8x256xf32> -> vector<8x256xf32>
    %275 = vector.extract_strided_slice %274 {offsets = [0, 0], sizes = [8, 128], strides = [1, 1]} : vector<8x256xf32> to vector<8x128xf32>
    %276 = vector.extract_strided_slice %274 {offsets = [0, 128], sizes = [8, 128], strides = [1, 1]} : vector<8x256xf32> to vector<8x128xf32>
    %277 = arith.addf %276, %252 : vector<8x128xf32>
    %278 = arith.addf %277, %24 : vector<8x128xf32>
    %279 = arith.negf %278 : vector<8x128xf32>
    %280 = math.exp %279 : vector<8x128xf32>
    %cst_63 = arith.constant 1.000000e+00 : f32
    %281 = vector.broadcast %cst_63 : f32 to vector<8x128xf32>
    %282 = arith.addf %281, %280 : vector<8x128xf32>
    %283 = arith.divf %281, %282 : vector<8x128xf32>
    %284 = vector.extract_strided_slice %283 {offsets = [0, 0], sizes = [8, 32], strides = [1, 1]} : vector<8x128xf32> to vector<8x32xf32>
    %285 = vector.extract_strided_slice %283 {offsets = [0, 32], sizes = [8, 32], strides = [1, 1]} : vector<8x128xf32> to vector<8x32xf32>
    %286 = vector.extract_strided_slice %283 {offsets = [0, 64], sizes = [8, 32], strides = [1, 1]} : vector<8x128xf32> to vector<8x32xf32>
    %cst_64 = arith.constant 2.000000e+00 : f32
    %287 = vector.broadcast %cst_64 : f32 to vector<8x32xf32>
    %288 = arith.mulf %287, %286 : vector<8x32xf32>
    %cst_65 = arith.constant 1.000000e+00 : f32
    %289 = vector.broadcast %cst_65 : f32 to vector<8x32xf32>
    %290 = arith.subf %288, %289 : vector<8x32xf32>
    %291 = vector.extract_strided_slice %283 {offsets = [0, 96], sizes = [8, 32], strides = [1, 1]} : vector<8x128xf32> to vector<8x32xf32>
    %292 = arith.mulf %285, %249 : vector<8x32xf32>
    %293 = arith.mulf %284, %290 : vector<8x32xf32>
    %294 = arith.addf %292, %293 : vector<8x32xf32>
    %295 = math.tanh %294 : vector<8x32xf32>
    %296 = arith.mulf %291, %295 : vector<8x32xf32>
    %cst_66 = arith.constant dense<0.000000e+00> : vector<8x128xf32>
    %297 = tpu.matmul %296, %21, %cst_66 {dimension_numbers = #tpu.dot_dimension_numbers<[1], [0], [0], [1], [0, 0, 1, 1], [], []>} : vector<8x32xf32>, vector<32x128xf32>, vector<8x128xf32> -> vector<8x128xf32>
    %298 = vector.extract_strided_slice %19 {offsets = [6, 0, 0], sizes = [1, 8, 128], strides = [1, 1, 1]} : vector<8x8x128xf32> to vector<1x8x128xf32>
    %299 = vector.shape_cast %298 : vector<1x8x128xf32> to vector<8x128xf32>
    %300 = arith.addf %299, %275 : vector<8x128xf32>
    %301 = arith.negf %300 : vector<8x128xf32>
    %302 = math.exp %301 : vector<8x128xf32>
    %cst_67 = arith.constant 1.000000e+00 : f32
    %303 = vector.broadcast %cst_67 : f32 to vector<8x128xf32>
    %304 = arith.addf %303, %302 : vector<8x128xf32>
    %305 = arith.divf %303, %304 : vector<8x128xf32>
    %306 = vector.extract_strided_slice %305 {offsets = [0, 0], sizes = [8, 32], strides = [1, 1]} : vector<8x128xf32> to vector<8x32xf32>
    %307 = vector.extract_strided_slice %305 {offsets = [0, 32], sizes = [8, 32], strides = [1, 1]} : vector<8x128xf32> to vector<8x32xf32>
    %308 = vector.extract_strided_slice %305 {offsets = [0, 64], sizes = [8, 32], strides = [1, 1]} : vector<8x128xf32> to vector<8x32xf32>
    %cst_68 = arith.constant 2.000000e+00 : f32
    %309 = vector.broadcast %cst_68 : f32 to vector<8x32xf32>
    %310 = arith.mulf %309, %308 : vector<8x32xf32>
    %cst_69 = arith.constant 1.000000e+00 : f32
    %311 = vector.broadcast %cst_69 : f32 to vector<8x32xf32>
    %312 = arith.subf %310, %311 : vector<8x32xf32>
    %313 = vector.extract_strided_slice %305 {offsets = [0, 96], sizes = [8, 32], strides = [1, 1]} : vector<8x128xf32> to vector<8x32xf32>
    %314 = arith.mulf %307, %271 : vector<8x32xf32>
    %315 = arith.mulf %306, %312 : vector<8x32xf32>
    %316 = arith.addf %314, %315 : vector<8x32xf32>
    %317 = math.tanh %316 : vector<8x32xf32>
    %318 = arith.mulf %313, %317 : vector<8x32xf32>
    %cst_70 = arith.constant dense<0.000000e+00> : vector<8x256xf32>
    %319 = tpu.matmul %318, %20, %cst_70 {dimension_numbers = #tpu.dot_dimension_numbers<[1], [0], [0], [1], [0, 0, 1, 1], [], []>} : vector<8x32xf32>, vector<32x256xf32>, vector<8x256xf32> -> vector<8x256xf32>
    %320 = vector.extract_strided_slice %319 {offsets = [0, 0], sizes = [8, 128], strides = [1, 1]} : vector<8x256xf32> to vector<8x128xf32>
    %321 = vector.extract_strided_slice %319 {offsets = [0, 128], sizes = [8, 128], strides = [1, 1]} : vector<8x256xf32> to vector<8x128xf32>
    %322 = arith.addf %321, %297 : vector<8x128xf32>
    %323 = arith.addf %322, %24 : vector<8x128xf32>
    %324 = arith.negf %323 : vector<8x128xf32>
    %325 = math.exp %324 : vector<8x128xf32>
    %cst_71 = arith.constant 1.000000e+00 : f32
    %326 = vector.broadcast %cst_71 : f32 to vector<8x128xf32>
    %327 = arith.addf %326, %325 : vector<8x128xf32>
    %328 = arith.divf %326, %327 : vector<8x128xf32>
    %329 = vector.extract_strided_slice %328 {offsets = [0, 0], sizes = [8, 32], strides = [1, 1]} : vector<8x128xf32> to vector<8x32xf32>
    %330 = vector.extract_strided_slice %328 {offsets = [0, 32], sizes = [8, 32], strides = [1, 1]} : vector<8x128xf32> to vector<8x32xf32>
    %331 = vector.extract_strided_slice %328 {offsets = [0, 64], sizes = [8, 32], strides = [1, 1]} : vector<8x128xf32> to vector<8x32xf32>
    %cst_72 = arith.constant 2.000000e+00 : f32
    %332 = vector.broadcast %cst_72 : f32 to vector<8x32xf32>
    %333 = arith.mulf %332, %331 : vector<8x32xf32>
    %cst_73 = arith.constant 1.000000e+00 : f32
    %334 = vector.broadcast %cst_73 : f32 to vector<8x32xf32>
    %335 = arith.subf %333, %334 : vector<8x32xf32>
    %336 = vector.extract_strided_slice %328 {offsets = [0, 96], sizes = [8, 32], strides = [1, 1]} : vector<8x128xf32> to vector<8x32xf32>
    %337 = arith.mulf %330, %294 : vector<8x32xf32>
    %338 = arith.mulf %329, %335 : vector<8x32xf32>
    %339 = arith.addf %337, %338 : vector<8x32xf32>
    %340 = math.tanh %339 : vector<8x32xf32>
    %341 = arith.mulf %336, %340 : vector<8x32xf32>
    %cst_74 = arith.constant dense<0.000000e+00> : vector<8x128xf32>
    %342 = tpu.matmul %341, %21, %cst_74 {dimension_numbers = #tpu.dot_dimension_numbers<[1], [0], [0], [1], [0, 0, 1, 1], [], []>} : vector<8x32xf32>, vector<32x128xf32>, vector<8x128xf32> -> vector<8x128xf32>
    %343 = vector.extract_strided_slice %19 {offsets = [7, 0, 0], sizes = [1, 8, 128], strides = [1, 1, 1]} : vector<8x8x128xf32> to vector<1x8x128xf32>
    %344 = vector.shape_cast %343 : vector<1x8x128xf32> to vector<8x128xf32>
    %345 = arith.addf %344, %320 : vector<8x128xf32>
    %346 = arith.negf %345 : vector<8x128xf32>
    %347 = math.exp %346 : vector<8x128xf32>
    %cst_75 = arith.constant 1.000000e+00 : f32
    %348 = vector.broadcast %cst_75 : f32 to vector<8x128xf32>
    %349 = arith.addf %348, %347 : vector<8x128xf32>
    %350 = arith.divf %348, %349 : vector<8x128xf32>
    %351 = vector.extract_strided_slice %350 {offsets = [0, 0], sizes = [8, 32], strides = [1, 1]} : vector<8x128xf32> to vector<8x32xf32>
    %352 = vector.extract_strided_slice %350 {offsets = [0, 32], sizes = [8, 32], strides = [1, 1]} : vector<8x128xf32> to vector<8x32xf32>
    %353 = vector.extract_strided_slice %350 {offsets = [0, 64], sizes = [8, 32], strides = [1, 1]} : vector<8x128xf32> to vector<8x32xf32>
    %cst_76 = arith.constant 2.000000e+00 : f32
    %354 = vector.broadcast %cst_76 : f32 to vector<8x32xf32>
    %355 = arith.mulf %354, %353 : vector<8x32xf32>
    %cst_77 = arith.constant 1.000000e+00 : f32
    %356 = vector.broadcast %cst_77 : f32 to vector<8x32xf32>
    %357 = arith.subf %355, %356 : vector<8x32xf32>
    %358 = vector.extract_strided_slice %350 {offsets = [0, 96], sizes = [8, 32], strides = [1, 1]} : vector<8x128xf32> to vector<8x32xf32>
    %359 = arith.mulf %352, %316 : vector<8x32xf32>
    %360 = arith.mulf %351, %357 : vector<8x32xf32>
    %361 = arith.addf %359, %360 : vector<8x32xf32>
    %362 = math.tanh %361 : vector<8x32xf32>
    %363 = arith.mulf %358, %362 : vector<8x32xf32>
    %cst_78 = arith.constant dense<0.000000e+00> : vector<8x256xf32>
    %364 = tpu.matmul %363, %20, %cst_78 {dimension_numbers = #tpu.dot_dimension_numbers<[1], [0], [0], [1], [0, 0, 1, 1], [], []>} : vector<8x32xf32>, vector<32x256xf32>, vector<8x256xf32> -> vector<8x256xf32>
    %365 = vector.extract_strided_slice %364 {offsets = [0, 128], sizes = [8, 128], strides = [1, 1]} : vector<8x256xf32> to vector<8x128xf32>
    %366 = arith.addf %365, %342 : vector<8x128xf32>
    %367 = arith.addf %366, %24 : vector<8x128xf32>
    %368 = arith.negf %367 : vector<8x128xf32>
    %369 = math.exp %368 : vector<8x128xf32>
    %cst_79 = arith.constant 1.000000e+00 : f32
    %370 = vector.broadcast %cst_79 : f32 to vector<8x128xf32>
    %371 = arith.addf %370, %369 : vector<8x128xf32>
    %372 = arith.divf %370, %371 : vector<8x128xf32>
    %373 = vector.extract_strided_slice %372 {offsets = [0, 0], sizes = [8, 32], strides = [1, 1]} : vector<8x128xf32> to vector<8x32xf32>
    %374 = vector.extract_strided_slice %372 {offsets = [0, 32], sizes = [8, 32], strides = [1, 1]} : vector<8x128xf32> to vector<8x32xf32>
    %375 = vector.extract_strided_slice %372 {offsets = [0, 64], sizes = [8, 32], strides = [1, 1]} : vector<8x128xf32> to vector<8x32xf32>
    %cst_80 = arith.constant 2.000000e+00 : f32
    %376 = vector.broadcast %cst_80 : f32 to vector<8x32xf32>
    %377 = arith.mulf %376, %375 : vector<8x32xf32>
    %cst_81 = arith.constant 1.000000e+00 : f32
    %378 = vector.broadcast %cst_81 : f32 to vector<8x32xf32>
    %379 = arith.subf %377, %378 : vector<8x32xf32>
    %380 = vector.extract_strided_slice %372 {offsets = [0, 96], sizes = [8, 32], strides = [1, 1]} : vector<8x128xf32> to vector<8x32xf32>
    %381 = arith.mulf %374, %339 : vector<8x32xf32>
    %382 = arith.mulf %373, %379 : vector<8x32xf32>
    %383 = arith.addf %381, %382 : vector<8x32xf32>
    %384 = math.tanh %383 : vector<8x32xf32>
    %385 = arith.mulf %380, %384 : vector<8x32xf32>
    %c0_82 = arith.constant 0 : index
    %c0_83 = arith.constant 0 : index
    %386 = vector.load %arg8[%c0_82, %c0_83] : memref<1x64xf32, #tpu.memory_space<vmem>>, vector<1x64xf32>
    %387 = vector.extract_strided_slice %386 {offsets = [0, 0], sizes = [1, 32], strides = [1, 1]} : vector<1x64xf32> to vector<1x32xf32>
    %388 = vector.broadcast %387 : vector<1x32xf32> to vector<8x32xf32>
    %389 = arith.mulf %363, %388 : vector<8x32xf32>
    %390 = vector.extract_strided_slice %386 {offsets = [0, 32], sizes = [1, 32], strides = [1, 1]} : vector<1x64xf32> to vector<1x32xf32>
    %391 = vector.broadcast %390 : vector<1x32xf32> to vector<8x32xf32>
    %392 = arith.mulf %385, %391 : vector<8x32xf32>
    %393 = arith.addf %389, %392 : vector<8x32xf32>
    %cst_84 = arith.constant dense<0.000000e+00> : vector<8xf32>
    %394 = vector.multi_reduction <add>, %393, %cst_84 [1] : vector<8x32xf32> to vector<8xf32>
    %395 = vector.shape_cast %394 : vector<8xf32> to vector<8x1xf32>
    %c0_85 = arith.constant 0 : index
    %c0_86 = arith.constant 0 : index
    %396 = vector.load %arg9[%c0_85, %c0_86] : memref<1x1xf32, #tpu.memory_space<vmem>>, vector<1x1xf32>
    %397 = vector.broadcast %396 : vector<1x1xf32> to vector<8x1xf32>
    %398 = arith.addf %395, %397 : vector<8x1xf32>
    %c0_87 = arith.constant 0 : index
    %c0_88 = arith.constant 0 : index
    %399 = vector.load %arg10[%c0_87, %c0_88] : memref<8x1xf32, #tpu.memory_space<vmem>>, vector<8x1xf32>
    tpu.vector_store %arg10[%c0_87, %c0_88], %398 {strides = array<i32>} : memref<8x1xf32, #tpu.memory_space<vmem>>, vector<8x1xf32>,
    return
  }
}

</mosaic_0001>

<llo_original>
// kernel: lstm_model_forward.1
$region0: #{lstm_model_forward.1}
  #allocation0 [shape = 'u32[]', space=smem, size = 0x4, offset = 0x4, fixed_abs, tag = 'smem constant byte address 0x4 - core index']
  #allocation1 [shape = 'u32[72,128]{1,0:T(1,128)}', space=vmem, size = 0x9000, scoped, tag = 'internal scratch']
  #allocation2 [shape = 'f32[1,1]{1,0:T(1,128)S(1)}', space=vmem, size = 0x200, scoped, tag = 'scoped memory for lstm_model_forward.1']
  %s0 = inlined_call_operand.vmem [shape: f32[8,8], index: 0, kind: input, shape index: {}]
  %s1 = inlined_call_operand.vmem [shape: f32[1,32], index: 1, kind: input, shape index: {}]
  %s2 = inlined_call_operand.vmem [shape: f32[1,32], index: 2, kind: input, shape index: {}]
  %s3 = inlined_call_operand.vmem [shape: f32[32,128], index: 3, kind: input, shape index: {}]
  %s4 = inlined_call_operand.vmem [shape: f32[1,128], index: 4, kind: input, shape index: {}]
  %s5 = inlined_call_operand.hbm [shape: f32[32,256], index: 5, kind: input, shape index: {}]
  %s6 = inlined_call_operand.hbm [shape: f32[32,128], index: 6, kind: input, shape index: {}]
  %s7 = inlined_call_operand.vmem [shape: f32[1,128], index: 7, kind: input, shape index: {}]
  %s8 = inlined_call_operand.vmem [shape: f32[1,64], index: 8, kind: input, shape index: {}]
  %s9 = inlined_call_operand.<no memory space> [shape: f32[1,1], index: 9, kind: input, shape index: {}]
  %s10 = inlined_call_operand.vmem [shape: f32[8,1], index: 10, kind: output, shape index: {}]
  %s11 = sld [smem:[#allocation0]]
  $region58: #{lstm_model_forward.1} parent=0
    _
  %s13 = ssub.s32 1, %s11
  %s14 = scalar_select 0, %s13, %s11
  %v15 = vstv %s9
  %16 = vst [vmem:[#allocation2] sm:$0x1] %v15
  $region1: #{lstm_model_forward.1} parent=0
    #allocation3 [shape = 'u8[32768]{0}', space=vmem, size = 0x8000, scoped, tag = 'input window, operand 5, single buffered']
    #allocation4 [shape = 's32[1]{0}', space=sflag, size = 0x4, scoped, tag = 'scoped memory for lstm_model_forward.1']
    #allocation5 [shape = 'u8[16384]{0}', space=vmem, size = 0x4000, scoped, tag = 'input window, operand 6, single buffered']
    #allocation6 [shape = 's32[1]{0}', space=sflag, size = 0x4, scoped, tag = 'scoped memory for lstm_model_forward.1']
    %17 = vsyncpa [#allocation4], 0
    %18 = vsyncpa [#allocation6], 0
    // Predicated region
    $region2: #{lstm_model_forward.1} parent=1 // pred_check
      _
    $region3: #{lstm_model_forward.1} parent=1 // pred_check_branch
      %20 = sbr.rel (0) target = $region5
    $region4: #{lstm_model_forward.1} parent=1 // pred_region
      _
    $region5: #{lstm_model_forward.1} parent=1 // pred_fallthru
      _
    // Predicated region
    $region6: #{lstm_model_forward.1} parent=1 // pred_check
      _
    $region7: #{lstm_model_forward.1} parent=1 // pred_check_branch
      %22 = sbr.rel (0) target = $region9
    $region8: #{lstm_model_forward.1} parent=1 // pred_region
      _
    $region9: #{lstm_model_forward.1} parent=1 // pred_fallthru
      _
    // Predicated region
    $region10: #{lstm_model_forward.1} parent=1 // pred_check
      _
    $region11: #{lstm_model_forward.1} parent=1 // pred_check_branch
      %24 = sbr.rel (0) target = $region13
    $region12: #{lstm_model_forward.1} parent=1 // pred_region
      _
    $region13: #{lstm_model_forward.1} parent=1 // pred_fallthru
      _
    // Predicated region
    $region14: #{lstm_model_forward.1} parent=1 // pred_check
      _
    $region15: #{lstm_model_forward.1} parent=1 // pred_check_branch
      %26 = sbr.rel (0) target = $region17
    $region16: #{lstm_model_forward.1} parent=1 // pred_region
      _
    $region17: #{lstm_model_forward.1} parent=1 // pred_fallthru
      _
    // Predicated region
    $region18: #{lstm_model_forward.1} parent=1 // pred_check
      _
    $region19: #{lstm_model_forward.1} parent=1 // pred_check_branch
      %28 = sbr.rel (0) target = $region21
    $region20: #{lstm_model_forward.1} parent=1 // pred_region
      _
    $region21: #{lstm_model_forward.1} parent=1 // pred_fallthru
      _
    // Predicated region
    $region22: #{lstm_model_forward.1} parent=1 // pred_check
      _
    $region23: #{lstm_model_forward.1} parent=1 // pred_check_branch
      %30 = sbr.rel (0) target = $region25
    $region24: #{lstm_model_forward.1} parent=1 // pred_region
      %32 = vsyncadd [#allocation4], 0
      %s33 = sshll.u32 %s5, 4
      %s34 = int_to_ptr.hbm [resolvable:$true] %s33
      %s35 = sshll.u32 [#allocation3], 4
      %s36 = int_to_ptr.vmem [resolvable:$true] %s35
      %41 = dma.hbm_to_vmem [thread:$0]  %s34, 1024, %s36, [#allocation4], 256, 256, 16
    $region25: #{lstm_model_forward.1} parent=1 // pred_fallthru
      _
    // Predicated region
    $region26: #{lstm_model_forward.1} parent=1 // pred_check
      _
    $region27: #{lstm_model_forward.1} parent=1 // pred_check_branch
      %43 = sbr.rel (0) target = $region29
    $region28: #{lstm_model_forward.1} parent=1 // pred_region
      %45 = vsyncadd [#allocation6], 0
      %s46 = sshll.u32 %s6, 4
      %s47 = int_to_ptr.hbm [resolvable:$true] %s46
      %s48 = sshll.u32 [#allocation5], 4
      %s49 = int_to_ptr.vmem [resolvable:$true] %s48
      %54 = dma.hbm_to_vmem [thread:$0]  %s47, 512, %s49, [#allocation6], 128, 128, 8
    $region29: #{lstm_model_forward.1} parent=1 // pred_fallthru
      _
    // Predicated region
    $region30: #{lstm_model_forward.1} parent=1 // pred_check
      _
    $region31: #{lstm_model_forward.1} parent=1 // pred_check_branch
      %56 = sbr.rel (0) target = $region33
    $region32: #{lstm_model_forward.1} parent=1 // pred_region
      _
    $region33: #{lstm_model_forward.1} parent=1 // pred_fallthru
      _
    // Predicated region
    $region34: #{lstm_model_forward.1} parent=1 // pred_check
      _
    $region35: #{lstm_model_forward.1} parent=1 // pred_check_branch
      %58 = sbr.rel (0) target = $region37
    $region36: #{lstm_model_forward.1} parent=1 // pred_region
      _
    $region37: #{lstm_model_forward.1} parent=1 // pred_fallthru
      _
    // Predicated region
    $region38: #{lstm_model_forward.1} parent=1 // pred_check
      _
    $region39: #{lstm_model_forward.1} parent=1 // pred_check_branch
      %60 = sbr.rel (0) target = $region41
    $region40: #{lstm_model_forward.1} parent=1 // pred_region
      _
    $region41: #{lstm_model_forward.1} parent=1 // pred_fallthru
      _
    // Predicated region
    $region42: #{lstm_model_forward.1} parent=1 // pred_check
      _
    $region43: #{lstm_model_forward.1} parent=1 // pred_check_branch
      %62 = sbr.rel (0) target = $region45
    $region44: #{lstm_model_forward.1} parent=1 // pred_region
      %64 = dma.done [#allocation4], 1024
    $region45: #{lstm_model_forward.1} parent=1 // pred_fallthru
      _
    // Predicated region
    $region46: #{lstm_model_forward.1} parent=1 // pred_check
      _
    $region47: #{lstm_model_forward.1} parent=1 // pred_check_branch
      %66 = sbr.rel (0) target = $region49
    $region48: #{lstm_model_forward.1} parent=1 // pred_region
      %68 = dma.done [#allocation6], 512
    $region49: #{lstm_model_forward.1} parent=1 // pred_fallthru
      _
    %v69 = vld [vmem:[%s0] sm:$0xff]
    %v70 = vperm.slane %v69, 0
    %v71 = vlaneseq
    %v72 = vshrl.u32 %v71, 7
    %74 = vset.pattern.permute.xlu0 %v72
    %75 = vperm.xlu0 %74, %v70
    %v76 = vpop.permute.xlu0 %75
    %v77 = vperm.slane %v69, 1
    %v78 = vlaneseq
    %v79 = vshrl.u32 %v78, 7
    %81 = vset.pattern.permute.xlu0 %v79
    %82 = vperm.xlu0 %81, %v77
    %v83 = vpop.permute.xlu0 %82
    %v84 = vperm.slane %v69, 2
    %v85 = vlaneseq
    %v86 = vshrl.u32 %v85, 7
    %88 = vset.pattern.permute.xlu0 %v86
    %89 = vperm.xlu0 %88, %v84
    %v90 = vpop.permute.xlu0 %89
    %v91 = vperm.slane %v69, 3
    %v92 = vlaneseq
    %v93 = vshrl.u32 %v92, 7
    %95 = vset.pattern.permute.xlu0 %v93
    %96 = vperm.xlu0 %95, %v91
    %v97 = vpop.permute.xlu0 %96
    %v98 = vperm.slane %v69, 4
    %v99 = vlaneseq
    %v100 = vshrl.u32 %v99, 7
    %102 = vset.pattern.permute.xlu0 %v100
    %103 = vperm.xlu0 %102, %v98
    %v104 = vpop.permute.xlu0 %103
    %v105 = vperm.slane %v69, 5
    %v106 = vlaneseq
    %v107 = vshrl.u32 %v106, 7
    %109 = vset.pattern.permute.xlu0 %v107
    %110 = vperm.xlu0 %109, %v105
    %v111 = vpop.permute.xlu0 %110
    %v112 = vperm.slane %v69, 6
    %v113 = vlaneseq
    %v114 = vshrl.u32 %v113, 7
    %116 = vset.pattern.permute.xlu0 %v114
    %117 = vperm.xlu0 %116, %v112
    %v118 = vpop.permute.xlu0 %117
    %v119 = vperm.slane %v69, 7
    %v120 = vlaneseq
    %v121 = vshrl.u32 %v120, 7
    %123 = vset.pattern.permute.xlu0 %v121
    %124 = vperm.xlu0 %123, %v119
    %v125 = vpop.permute.xlu0 %124
    %v126 = vld [vmem:[%s1] sm:$0x1]
    %v128 = vperm.slane %v126, 0
    %v130 = vmul.f32 %v76, %v128
    %v131 = vmul.f32 %v83, %v128
    %v132 = vmul.f32 %v90, %v128
    %v133 = vmul.f32 %v97, %v128
    %v134 = vmul.f32 %v104, %v128
    %v135 = vmul.f32 %v111, %v128
    %v136 = vmul.f32 %v118, %v128
    %v137 = vmul.f32 %v125, %v128
    %v138 = vld [vmem:[%s2] sm:$0x1]
    %v140 = vperm.slane %v138, 0
    %v142 = vadd.f32 %v130, %v140
    %v143 = vadd.f32 %v131, %v140
    %v144 = vadd.f32 %v132, %v140
    %v145 = vadd.f32 %v133, %v140
    %v146 = vadd.f32 %v134, %v140
    %v147 = vadd.f32 %v135, %v140
    %v148 = vadd.f32 %v136, %v140
    %v149 = vadd.f32 %v137, %v140
    %v150 = vmax.f32 %v142, 0.0
    %v151 = vmax.f32 %v143, 0.0
    %v152 = vmax.f32 %v144, 0.0
    %v153 = vmax.f32 %v145, 0.0
    %v154 = vmax.f32 %v146, 0.0
    %v155 = vmax.f32 %v147, 0.0
    %v156 = vmax.f32 %v148, 0.0
    %v157 = vmax.f32 %v149, 0.0
    %v158 = vld [vmem:[%s3] sm:$0xff]
    %v159 = vld [vmem:[%s3 + $0x8] sm:$0xff]
    %v160 = vld [vmem:[%s3 + $0x10] sm:$0xff]
    %v161 = vld [vmem:[%s3 + $0x18] sm:$0xff]
    %v162 = vld [vmem:[%s4] sm:$0x1]
    %v164 = vperm.slane %v162, 0
    %vm166 = vcmask 261120
    %v168 = vsel %vm166, %v150, 0
    %v171 = vsel %vm166, %v151, 0
    %v174 = vsel %vm166, %v152, 0
    %v177 = vsel %vm166, %v153, 0
    %v180 = vsel %vm166, %v154, 0
    %v183 = vsel %vm166, %v155, 0
    %v186 = vsel %vm166, %v156, 0
    %v189 = vsel %vm166, %v157, 0
    %191 = vmatpush.msra.mxu0 0.0
    %192 = vmatpush.msra.mxu0 0.0
    %193 = vmatpush.msra.mxu0 0.0
    %194 = vmatpush.msra.mxu0 0.0
    %195 = vmatpush.msra.mxu0 0.0
    %196 = vmatpush.msra.mxu0 0.0
    %197 = vmatpush.msra.mxu0 0.0
    %198 = vmatpush.msra.mxu0 0.0
    %199 = vmatpush.msra.mxu0 0.0
    %200 = vmatpush.msra.mxu0 0.0
    %201 = vmatpush.msra.mxu0 0.0
    %202 = vmatpush.msra.mxu0 0.0
    %203 = vmatpush.msra.mxu0 %v161
    %204 = vmatpush.msra.mxu0 %v160
    %205 = vmatpush.msra.mxu0 %v159
    %206 = vmatpush.msra.mxu0 %v158
    %207 = vmatmul.f32.gmra.mxu0 %v168
    %v208 = vpop.f32.mrf.mxu0
    %v209 = vadd.f32 %v164, %v208
    %210 = vmatmul.f32.gmra.mxu0 %v171
    %v211 = vpop.f32.mrf.mxu0
    %v212 = vadd.f32 %v164, %v211
    %213 = vmatmul.f32.gmra.mxu0 %v174
    %v214 = vpop.f32.mrf.mxu0
    %v215 = vadd.f32 %v164, %v214
    %216 = vmatmul.f32.gmra.mxu0 %v177
    %v217 = vpop.f32.mrf.mxu0
    %v218 = vadd.f32 %v164, %v217
    %219 = vmatmul.f32.gmra.mxu0 %v180
    %v220 = vpop.f32.mrf.mxu0
    %v221 = vadd.f32 %v164, %v220
    %222 = vmatmul.f32.gmra.mxu0 %v183
    %v223 = vpop.f32.mrf.mxu0
    %v224 = vadd.f32 %v164, %v223
    %225 = vmatmul.f32.gmra.mxu0 %v186
    %v226 = vpop.f32.mrf.mxu0
    %v227 = vadd.f32 %v164, %v226
    %228 = vmatmul.f32.gmra.mxu0 %v189
    %v229 = vpop.f32.mrf.mxu0
    %v230 = vadd.f32 %v164, %v229
    %231 = vdwg.mxu0
    %v232 = vld [vmem:[#allocation3] sm:$0xff]
    %v233 = vld [vmem:[#allocation3 + $0x8] sm:$0xff]
    %v234 = vld [vmem:[#allocation3 + $0x10] sm:$0xff]
    %v235 = vld [vmem:[#allocation3 + $0x18] sm:$0xff]
    %v236 = vld [vmem:[#allocation3 + $0x20] sm:$0xff]
    %v237 = vld [vmem:[#allocation3 + $0x28] sm:$0xff]
    %v238 = vld [vmem:[#allocation3 + $0x30] sm:$0xff]
    %v239 = vld [vmem:[#allocation3 + $0x38] sm:$0xff]
    %v240 = vld [vmem:[#allocation5] sm:$0xff]
    %v241 = vld [vmem:[#allocation5 + $0x8] sm:$0xff]
    %v242 = vld [vmem:[#allocation5 + $0x10] sm:$0xff]
    %v243 = vld [vmem:[#allocation5 + $0x18] sm:$0xff]
    %v244 = vld [vmem:[%s7] sm:$0x1]
    %v246 = vperm.slane %v244, 0
    %v248 = vadd.f32 %v209, 0.0
    %v249 = vxor.u32 %v248, 2147483648
    %v250 = vmul.f32 %v249, 1.442695
    %v251 = vpow.pop %v250
    %v252 = vadd.f32 %v251, 1.0
    %v253 = vrcp.pop %v252
    %v254 = vmul.f32 %v252, %v253
    %v255 = vsub.f32 1.0, %v254
    %v256 = vmul.f32 %v253, %v255
    %v257 = vadd.f32 %v253, %v256
    %vm258 = vweird.f32 %v252
    %vm259 = vweird.f32 %v253
    %vm260 = vmor %vm258, %vm259
    %v261 = vsel %vm260, %v253, %v257
    %v262 = vand.u32 2147483647, %v252
    %vm263 = vcmp.eq.f32.partialorder %v262, 8.507059e+37
    %v264 = vand.u32 %v252, 2147483648
    %v265 = vor.u32 1.1754944e-38, %v264
    %v266 = vsel %vm263, %v265, %v261
    %v267 = vmul.f32 1.0, %v266
    %v268 = vmul.f32 %v267, 2.0
    %v269 = vsub.f32 %v268, 1.0
    %v270 = vmul.f32 %v267, 0.0
    %272 = vrot.lane.b32.xlu0 %v269, 64
    %v273 = vpop.permute.xlu0 %272
    %v275 = vmul.f32 %v267, %v273
    %277 = vrot.lane.b32.xlu0 %v275, 32
    %v278 = vpop.permute.xlu0 %277
    %v280 = vadd.f32 %v270, %v278
    %v281 = vtanh.pop %v280
    %283 = vrot.lane.b32.xlu0 %v281, 64
    %v284 = vpop.permute.xlu0 %283
    %v286 = vmul.f32 %v267, %v284
    %288 = vrot.lane.b32.xlu0 %v286, 32
    %v289 = vpop.permute.xlu0 %288
    %v290 = vsel %vm166, %v289, 0
    %292 = vmatpush.msra.mxu0 0.0
    %293 = vmatpush.msra.mxu0 0.0
    %294 = vmatpush.msra.mxu0 0.0
    %295 = vmatpush.msra.mxu0 0.0
    %296 = vmatpush.msra.mxu0 0.0
    %297 = vmatpush.msra.mxu0 0.0
    %298 = vmatpush.msra.mxu0 0.0
    %299 = vmatpush.msra.mxu0 0.0
    %300 = vmatpush.msra.mxu0 0.0
    %301 = vmatpush.msra.mxu0 0.0
    %302 = vmatpush.msra.mxu0 0.0
    %303 = vmatpush.msra.mxu0 0.0
    %304 = vmatpush.msra.mxu0 %v238
    %305 = vmatpush.msra.mxu0 %v236
    %306 = vmatpush.msra.mxu0 %v234
    %307 = vmatpush.msra.mxu0 %v232
    %308 = vmatmul.f32.gmra.mxu0 %v290
    %v309 = vpop.f32.mrf.mxu0
    %v310 = vadd.f32 0.0, %v309
    %311 = vdwg.mxu0
    %312 = vmatpush.msra.mxu0 0.0
    %313 = vmatpush.msra.mxu0 0.0
    %314 = vmatpush.msra.mxu0 0.0
    %315 = vmatpush.msra.mxu0 0.0
    %316 = vmatpush.msra.mxu0 0.0
    %317 = vmatpush.msra.mxu0 0.0
    %318 = vmatpush.msra.mxu0 0.0
    %319 = vmatpush.msra.mxu0 0.0
    %320 = vmatpush.msra.mxu0 0.0
    %321 = vmatpush.msra.mxu0 0.0
    %322 = vmatpush.msra.mxu0 0.0
    %323 = vmatpush.msra.mxu0 0.0
    %324 = vmatpush.msra.mxu0 %v239
    %325 = vmatpush.msra.mxu0 %v237
    %326 = vmatpush.msra.mxu0 %v235
    %327 = vmatpush.msra.mxu0 %v233
    %328 = vmatmul.f32.gmra.mxu0 %v290
    %v329 = vpop.f32.mrf.mxu0
    %v330 = vadd.f32 0.0, %v329
    %331 = vdwg.mxu0
    %v332 = vadd.f32 %v330, 0.0
    %v333 = vadd.f32 %v332, %v246
    %v334 = vxor.u32 %v333, 2147483648
    %v335 = vmul.f32 %v334, 1.442695
    %v336 = vpow.pop %v335
    %v337 = vadd.f32 %v336, 1.0
    %v338 = vrcp.pop %v337
    %v339 = vmul.f32 %v337, %v338
    %v340 = vsub.f32 1.0, %v339
    %v341 = vmul.f32 %v338, %v340
    %v342 = vadd.f32 %v338, %v341
    %vm343 = vweird.f32 %v337
    %vm344 = vweird.f32 %v338
    %vm345 = vmor %vm343, %vm344
    %v346 = vsel %vm345, %v338, %v342
    %v347 = vand.u32 2147483647, %v337
    %vm348 = vcmp.eq.f32.partialorder %v347, 8.507059e+37
    %v349 = vand.u32 %v337, 2147483648
    %v350 = vor.u32 1.1754944e-38, %v349
    %v351 = vsel %vm348, %v350, %v346
    %v352 = vmul.f32 1.0, %v351
    %v353 = vmul.f32 %v352, 2.0
    %v354 = vsub.f32 %v353, 1.0
    %v355 = vmul.f32 %v352, 0.0
    %357 = vrot.lane.b32.xlu0 %v354, 64
    %v358 = vpop.permute.xlu0 %357
    %v360 = vmul.f32 %v352, %v358
    %362 = vrot.lane.b32.xlu0 %v360, 32
    %v363 = vpop.permute.xlu0 %362
    %v365 = vadd.f32 %v355, %v363
    %v366 = vtanh.pop %v365
    %368 = vrot.lane.b32.xlu0 %v366, 64
    %v369 = vpop.permute.xlu0 %368
    %v371 = vmul.f32 %v352, %v369
    %373 = vrot.lane.b32.xlu0 %v371, 32
    %v374 = vpop.permute.xlu0 %373
    %v375 = vsel %vm166, %v374, 0
    %377 = vmatpush.msra.mxu0 0.0
    %378 = vmatpush.msra.mxu0 0.0
    %379 = vmatpush.msra.mxu0 0.0
    %380 = vmatpush.msra.mxu0 0.0
    %381 = vmatpush.msra.mxu0 0.0
    %382 = vmatpush.msra.mxu0 0.0
    %383 = vmatpush.msra.mxu0 0.0
    %384 = vmatpush.msra.mxu0 0.0
    %385 = vmatpush.msra.mxu0 0.0
    %386 = vmatpush.msra.mxu0 0.0
    %387 = vmatpush.msra.mxu0 0.0
    %388 = vmatpush.msra.mxu0 0.0
    %389 = vmatpush.msra.mxu0 %v243
    %390 = vmatpush.msra.mxu0 %v242
    %391 = vmatpush.msra.mxu0 %v241
    %392 = vmatpush.msra.mxu0 %v240
    %393 = vmatmul.f32.gmra.mxu0 %v375
    %v394 = vpop.f32.mrf.mxu0
    %v395 = vadd.f32 0.0, %v394
    %396 = vdwg.mxu0
    %v397 = vadd.f32 %v212, %v310
    %v398 = vxor.u32 %v397, 2147483648
    %v399 = vmul.f32 %v398, 1.442695
    %v400 = vpow.pop %v399
    %v401 = vadd.f32 %v400, 1.0
    %v402 = vrcp.pop %v401
    %v403 = vmul.f32 %v401, %v402
    %v404 = vsub.f32 1.0, %v403
    %v405 = vmul.f32 %v402, %v404
    %v406 = vadd.f32 %v402, %v405
    %vm407 = vweird.f32 %v401
    %vm408 = vweird.f32 %v402
    %vm409 = vmor %vm407, %vm408
    %v410 = vsel %vm409, %v402, %v406
    %v411 = vand.u32 2147483647, %v401
    %vm412 = vcmp.eq.f32.partialorder %v411, 8.507059e+37
    %v413 = vand.u32 %v401, 2147483648
    %v414 = vor.u32 1.1754944e-38, %v413
    %v415 = vsel %vm412, %v414, %v410
    %v416 = vmul.f32 1.0, %v415
    %v417 = vmul.f32 %v416, 2.0
    %v418 = vsub.f32 %v417, 1.0
    %v419 = vmul.f32 %v416, %v280
    %421 = vrot.lane.b32.xlu0 %v418, 64
    %v422 = vpop.permute.xlu0 %421
    %v424 = vmul.f32 %v416, %v422
    %426 = vrot.lane.b32.xlu0 %v424, 32
    %v427 = vpop.permute.xlu0 %426
    %v429 = vadd.f32 %v419, %v427
    %v430 = vtanh.pop %v429
    %432 = vrot.lane.b32.xlu0 %v430, 64
    %v433 = vpop.permute.xlu0 %432
    %v435 = vmul.f32 %v416, %v433
    %437 = vrot.lane.b32.xlu0 %v435, 32
    %v438 = vpop.permute.xlu0 %437
    %v439 = vsel %vm166, %v438, 0
    %441 = vmatpush.msra.mxu0 0.0
    %442 = vmatpush.msra.mxu0 0.0
    %443 = vmatpush.msra.mxu0 0.0
    %444 = vmatpush.msra.mxu0 0.0
    %445 = vmatpush.msra.mxu0 0.0
    %446 = vmatpush.msra.mxu0 0.0
    %447 = vmatpush.msra.mxu0 0.0
    %448 = vmatpush.msra.mxu0 0.0
    %449 = vmatpush.msra.mxu0 0.0
    %450 = vmatpush.msra.mxu0 0.0
    %451 = vmatpush.msra.mxu0 0.0
    %452 = vmatpush.msra.mxu0 0.0
    %453 = vmatpush.msra.mxu0 %v238
    %454 = vmatpush.msra.mxu0 %v236
    %455 = vmatpush.msra.mxu0 %v234
    %456 = vmatpush.msra.mxu0 %v232
    %457 = vmatmul.f32.gmra.mxu0 %v439
    %v458 = vpop.f32.mrf.mxu0
    %v459 = vadd.f32 0.0, %v458
    %460 = vdwg.mxu0
    %461 = vmatpush.msra.mxu0 0.0
    %462 = vmatpush.msra.mxu0 0.0
    %463 = vmatpush.msra.mxu0 0.0
    %464 = vmatpush.msra.mxu0 0.0
    %465 = vmatpush.msra.mxu0 0.0
    %466 = vmatpush.msra.mxu0 0.0
    %467 = vmatpush.msra.mxu0 0.0
    %468 = vmatpush.msra.mxu0 0.0
    %469 = vmatpush.msra.mxu0 0.0
    %470 = vmatpush.msra.mxu0 0.0
    %471 = vmatpush.msra.mxu0 0.0
    %472 = vmatpush.msra.mxu0 0.0
    %473 = vmatpush.msra.mxu0 %v239
    %474 = vmatpush.msra.mxu0 %v237
    %475 = vmatpush.msra.mxu0 %v235
    %476 = vmatpush.msra.mxu0 %v233
    %477 = vmatmul.f32.gmra.mxu0 %v439
    %v478 = vpop.f32.mrf.mxu0
    %v479 = vadd.f32 0.0, %v478
    %480 = vdwg.mxu0
    %v481 = vadd.f32 %v479, %v395
    %v482 = vadd.f32 %v481, %v246
    %v483 = vxor.u32 %v482, 2147483648
    %v484 = vmul.f32 %v483, 1.442695
    %v485 = vpow.pop %v484
    %v486 = vadd.f32 %v485, 1.0
    %v487 = vrcp.pop %v486
    %v488 = vmul.f32 %v486, %v487
    %v489 = vsub.f32 1.0, %v488
    %v490 = vmul.f32 %v487, %v489
    %v491 = vadd.f32 %v487, %v490
    %vm492 = vweird.f32 %v486
    %vm493 = vweird.f32 %v487
    %vm494 = vmor %vm492, %vm493
    %v495 = vsel %vm494, %v487, %v491
    %v496 = vand.u32 2147483647, %v486
    %vm497 = vcmp.eq.f32.partialorder %v496, 8.507059e+37
    %v498 = vand.u32 %v486, 2147483648
    %v499 = vor.u32 1.1754944e-38, %v498
    %v500 = vsel %vm497, %v499, %v495
    %v501 = vmul.f32 1.0, %v500
    %v502 = vmul.f32 %v501, 2.0
    %v503 = vsub.f32 %v502, 1.0
    %v504 = vmul.f32 %v501, %v365
    %506 = vrot.lane.b32.xlu0 %v503, 64
    %v507 = vpop.permute.xlu0 %506
    %v509 = vmul.f32 %v501, %v507
    %511 = vrot.lane.b32.xlu0 %v509, 32
    %v512 = vpop.permute.xlu0 %511
    %v514 = vadd.f32 %v504, %v512
    %v515 = vtanh.pop %v514
    %517 = vrot.lane.b32.xlu0 %v515, 64
    %v518 = vpop.permute.xlu0 %517
    %v520 = vmul.f32 %v501, %v518
    %522 = vrot.lane.b32.xlu0 %v520, 32
    %v523 = vpop.permute.xlu0 %522
    %v524 = vsel %vm166, %v523, 0
    %526 = vmatpush.msra.mxu0 0.0
    %527 = vmatpush.msra.mxu0 0.0
    %528 = vmatpush.msra.mxu0 0.0
    %529 = vmatpush.msra.mxu0 0.0
    %530 = vmatpush.msra.mxu0 0.0
    %531 = vmatpush.msra.mxu0 0.0
    %532 = vmatpush.msra.mxu0 0.0
    %533 = vmatpush.msra.mxu0 0.0
    %534 = vmatpush.msra.mxu0 0.0
    %535 = vmatpush.msra.mxu0 0.0
    %536 = vmatpush.msra.mxu0 0.0
    %537 = vmatpush.msra.mxu0 0.0
    %538 = vmatpush.msra.mxu0 %v243
    %539 = vmatpush.msra.mxu0 %v242
    %540 = vmatpush.msra.mxu0 %v241
    %541 = vmatpush.msra.mxu0 %v240
    %542 = vmatmul.f32.gmra.mxu0 %v524
    %v543 = vpop.f32.mrf.mxu0
    %v544 = vadd.f32 0.0, %v543
    %545 = vdwg.mxu0
    %v546 = vadd.f32 %v215, %v459
    %v547 = vxor.u32 %v546, 2147483648
    %v548 = vmul.f32 %v547, 1.442695
    %v549 = vpow.pop %v548
    %v550 = vadd.f32 %v549, 1.0
    %v551 = vrcp.pop %v550
    %v552 = vmul.f32 %v550, %v551
    %v553 = vsub.f32 1.0, %v552
    %v554 = vmul.f32 %v551, %v553
    %v555 = vadd.f32 %v551, %v554
    %vm556 = vweird.f32 %v550
    %vm557 = vweird.f32 %v551
    %vm558 = vmor %vm556, %vm557
    %v559 = vsel %vm558, %v551, %v555
    %v560 = vand.u32 2147483647, %v550
    %vm561 = vcmp.eq.f32.partialorder %v560, 8.507059e+37
    %v562 = vand.u32 %v550, 2147483648
    %v563 = vor.u32 1.1754944e-38, %v562
    %v564 = vsel %vm561, %v563, %v559
    %v565 = vmul.f32 1.0, %v564
    %v566 = vmul.f32 %v565, 2.0
    %v567 = vsub.f32 %v566, 1.0
    %v568 = vmul.f32 %v565, %v429
    %570 = vrot.lane.b32.xlu0 %v567, 64
    %v571 = vpop.permute.xlu0 %570
    %v573 = vmul.f32 %v565, %v571
    %575 = vrot.lane.b32.xlu0 %v573, 32
    %v576 = vpop.permute.xlu0 %575
    %v578 = vadd.f32 %v568, %v576
    %v579 = vtanh.pop %v578
    %581 = vrot.lane.b32.xlu0 %v579, 64
    %v582 = vpop.permute.xlu0 %581
    %v584 = vmul.f32 %v565, %v582
    %586 = vrot.lane.b32.xlu0 %v584, 32
    %v587 = vpop.permute.xlu0 %586
    %v588 = vsel %vm166, %v587, 0
    %590 = vmatpush.msra.mxu0 0.0
    %591 = vmatpush.msra.mxu0 0.0
    %592 = vmatpush.msra.mxu0 0.0
    %593 = vmatpush.msra.mxu0 0.0
    %594 = vmatpush.msra.mxu0 0.0
    %595 = vmatpush.msra.mxu0 0.0
    %596 = vmatpush.msra.mxu0 0.0
    %597 = vmatpush.msra.mxu0 0.0
    %598 = vmatpush.msra.mxu0 0.0
    %599 = vmatpush.msra.mxu0 0.0
    %600 = vmatpush.msra.mxu0 0.0
    %601 = vmatpush.msra.mxu0 0.0
    %602 = vmatpush.msra.mxu0 %v238
    %603 = vmatpush.msra.mxu0 %v236
    %604 = vmatpush.msra.mxu0 %v234
    %605 = vmatpush.msra.mxu0 %v232
    %606 = vmatmul.f32.gmra.mxu0 %v588
    %v607 = vpop.f32.mrf.mxu0
    %v608 = vadd.f32 0.0, %v607
    %609 = vdwg.mxu0
    %610 = vmatpush.msra.mxu0 0.0
    %611 = vmatpush.msra.mxu0 0.0
    %612 = vmatpush.msra.mxu0 0.0
    %613 = vmatpush.msra.mxu0 0.0
    %614 = vmatpush.msra.mxu0 0.0
    %615 = vmatpush.msra.mxu0 0.0
    %616 = vmatpush.msra.mxu0 0.0
    %617 = vmatpush.msra.mxu0 0.0
    %618 = vmatpush.msra.mxu0 0.0
    %619 = vmatpush.msra.mxu0 0.0
    %620 = vmatpush.msra.mxu0 0.0
    %621 = vmatpush.msra.mxu0 0.0
    %622 = vmatpush.msra.mxu0 %v239
    %623 = vmatpush.msra.mxu0 %v237
    %624 = vmatpush.msra.mxu0 %v235
    %625 = vmatpush.msra.mxu0 %v233
    %626 = vmatmul.f32.gmra.mxu0 %v588
    %v627 = vpop.f32.mrf.mxu0
    %v628 = vadd.f32 0.0, %v627
    %629 = vdwg.mxu0
    %v630 = vadd.f32 %v628, %v544
    %v631 = vadd.f32 %v630, %v246
    %v632 = vxor.u32 %v631, 2147483648
    %v633 = vmul.f32 %v632, 1.442695
    %v634 = vpow.pop %v633
    %v635 = vadd.f32 %v634, 1.0
    %v636 = vrcp.pop %v635
    %v637 = vmul.f32 %v635, %v636
    %v638 = vsub.f32 1.0, %v637
    %v639 = vmul.f32 %v636, %v638
    %v640 = vadd.f32 %v636, %v639
    %vm641 = vweird.f32 %v635
    %vm642 = vweird.f32 %v636
    %vm643 = vmor %vm641, %vm642
    %v644 = vsel %vm643, %v636, %v640
    %v645 = vand.u32 2147483647, %v635
    %vm646 = vcmp.eq.f32.partialorder %v645, 8.507059e+37
    %v647 = vand.u32 %v635, 2147483648
    %v648 = vor.u32 1.1754944e-38, %v647
    %v649 = vsel %vm646, %v648, %v644
    %v650 = vmul.f32 1.0, %v649
    %v651 = vmul.f32 %v650, 2.0
    %v652 = vsub.f32 %v651, 1.0
    %v653 = vmul.f32 %v650, %v514
    %655 = vrot.lane.b32.xlu0 %v652, 64
    %v656 = vpop.permute.xlu0 %655
    %v658 = vmul.f32 %v650, %v656
    %660 = vrot.lane.b32.xlu0 %v658, 32
    %v661 = vpop.permute.xlu0 %660
    %v663 = vadd.f32 %v653, %v661
    %v664 = vtanh.pop %v663
    %666 = vrot.lane.b32.xlu0 %v664, 64
    %v667 = vpop.permute.xlu0 %666
    %v669 = vmul.f32 %v650, %v667
    %671 = vrot.lane.b32.xlu0 %v669, 32
    %v672 = vpop.permute.xlu0 %671
    %v673 = vsel %vm166, %v672, 0
    %675 = vmatpush.msra.mxu0 0.0
    %676 = vmatpush.msra.mxu0 0.0
    %677 = vmatpush.msra.mxu0 0.0
    %678 = vmatpush.msra.mxu0 0.0
    %679 = vmatpush.msra.mxu0 0.0
    %680 = vmatpush.msra.mxu0 0.0
    %681 = vmatpush.msra.mxu0 0.0
    %682 = vmatpush.msra.mxu0 0.0
    %683 = vmatpush.msra.mxu0 0.0
    %684 = vmatpush.msra.mxu0 0.0
    %685 = vmatpush.msra.mxu0 0.0
    %686 = vmatpush.msra.mxu0 0.0
    %687 = vmatpush.msra.mxu0 %v243
    %688 = vmatpush.msra.mxu0 %v242
    %689 = vmatpush.msra.mxu0 %v241
    %690 = vmatpush.msra.mxu0 %v240
    %691 = vmatmul.f32.gmra.mxu0 %v673
    %v692 = vpop.f32.mrf.mxu0
    %v693 = vadd.f32 0.0, %v692
    %694 = vdwg.mxu0
    %v695 = vadd.f32 %v218, %v608
    %v696 = vxor.u32 %v695, 2147483648
    %v697 = vmul.f32 %v696, 1.442695
    %v698 = vpow.pop %v697
    %v699 = vadd.f32 %v698, 1.0
    %v700 = vrcp.pop %v699
    %v701 = vmul.f32 %v699, %v700
    %v702 = vsub.f32 1.0, %v701
    %v703 = vmul.f32 %v700, %v702
    %v704 = vadd.f32 %v700, %v703
    %vm705 = vweird.f32 %v699
    %vm706 = vweird.f32 %v700
    %vm707 = vmor %vm705, %vm706
    %v708 = vsel %vm707, %v700, %v704
    %v709 = vand.u32 2147483647, %v699
    %vm710 = vcmp.eq.f32.partialorder %v709, 8.507059e+37
    %v711 = vand.u32 %v699, 2147483648
    %v712 = vor.u32 1.1754944e-38, %v711
    %v713 = vsel %vm710, %v712, %v708
    %v714 = vmul.f32 1.0, %v713
    %v715 = vmul.f32 %v714, 2.0
    %v716 = vsub.f32 %v715, 1.0
    %v717 = vmul.f32 %v714, %v578
    %719 = vrot.lane.b32.xlu0 %v716, 64
    %v720 = vpop.permute.xlu0 %719
    %v722 = vmul.f32 %v714, %v720
    %724 = vrot.lane.b32.xlu0 %v722, 32
    %v725 = vpop.permute.xlu0 %724
    %v727 = vadd.f32 %v717, %v725
    %v728 = vtanh.pop %v727
    %730 = vrot.lane.b32.xlu0 %v728, 64
    %v731 = vpop.permute.xlu0 %730
    %v733 = vmul.f32 %v714, %v731
    %735 = vrot.lane.b32.xlu0 %v733, 32
    %v736 = vpop.permute.xlu0 %735
    %v737 = vsel %vm166, %v736, 0
    %739 = vmatpush.msra.mxu0 0.0
    %740 = vmatpush.msra.mxu0 0.0
    %741 = vmatpush.msra.mxu0 0.0
    %742 = vmatpush.msra.mxu0 0.0
    %743 = vmatpush.msra.mxu0 0.0
    %744 = vmatpush.msra.mxu0 0.0
    %745 = vmatpush.msra.mxu0 0.0
    %746 = vmatpush.msra.mxu0 0.0
    %747 = vmatpush.msra.mxu0 0.0
    %748 = vmatpush.msra.mxu0 0.0
    %749 = vmatpush.msra.mxu0 0.0
    %750 = vmatpush.msra.mxu0 0.0
    %751 = vmatpush.msra.mxu0 %v238
    %752 = vmatpush.msra.mxu0 %v236
    %753 = vmatpush.msra.mxu0 %v234
    %754 = vmatpush.msra.mxu0 %v232
    %755 = vmatmul.f32.gmra.mxu0 %v737
    %v756 = vpop.f32.mrf.mxu0
    %v757 = vadd.f32 0.0, %v756
    %758 = vdwg.mxu0
    %759 = vmatpush.msra.mxu0 0.0
    %760 = vmatpush.msra.mxu0 0.0
    %761 = vmatpush.msra.mxu0 0.0
    %762 = vmatpush.msra.mxu0 0.0
    %763 = vmatpush.msra.mxu0 0.0
    %764 = vmatpush.msra.mxu0 0.0
    %765 = vmatpush.msra.mxu0 0.0
    %766 = vmatpush.msra.mxu0 0.0
    %767 = vmatpush.msra.mxu0 0.0
    %768 = vmatpush.msra.mxu0 0.0
    %769 = vmatpush.msra.mxu0 0.0
    %770 = vmatpush.msra.mxu0 0.0
    %771 = vmatpush.msra.mxu0 %v239
    %772 = vmatpush.msra.mxu0 %v237
    %773 = vmatpush.msra.mxu0 %v235
    %774 = vmatpush.msra.mxu0 %v233
    %775 = vmatmul.f32.gmra.mxu0 %v737
    %v776 = vpop.f32.mrf.mxu0
    %v777 = vadd.f32 0.0, %v776
    %778 = vdwg.mxu0
    %v779 = vadd.f32 %v777, %v693
    %v780 = vadd.f32 %v779, %v246
    %v781 = vxor.u32 %v780, 2147483648
    %v782 = vmul.f32 %v781, 1.442695
    %v783 = vpow.pop %v782
    %v784 = vadd.f32 %v783, 1.0
    %v785 = vrcp.pop %v784
    %v786 = vmul.f32 %v784, %v785
    %v787 = vsub.f32 1.0, %v786
    %v788 = vmul.f32 %v785, %v787
    %v789 = vadd.f32 %v785, %v788
    %vm790 = vweird.f32 %v784
    %vm791 = vweird.f32 %v785
    %vm792 = vmor %vm790, %vm791
    %v793 = vsel %vm792, %v785, %v789
    %v794 = vand.u32 2147483647, %v784
    %vm795 = vcmp.eq.f32.partialorder %v794, 8.507059e+37
    %v796 = vand.u32 %v784, 2147483648
    %v797 = vor.u32 1.1754944e-38, %v796
    %v798 = vsel %vm795, %v797, %v793
    %v799 = vmul.f32 1.0, %v798
    %v800 = vmul.f32 %v799, 2.0
    %v801 = vsub.f32 %v800, 1.0
    %v802 = vmul.f32 %v799, %v663
    %804 = vrot.lane.b32.xlu0 %v801, 64
    %v805 = vpop.permute.xlu0 %804
    %v807 = vmul.f32 %v799, %v805
    %809 = vrot.lane.b32.xlu0 %v807, 32
    %v810 = vpop.permute.xlu0 %809
    %v812 = vadd.f32 %v802, %v810
    %v813 = vtanh.pop %v812
    %815 = vrot.lane.b32.xlu0 %v813, 64
    %v816 = vpop.permute.xlu0 %815
    %v818 = vmul.f32 %v799, %v816
    %820 = vrot.lane.b32.xlu0 %v818, 32
    %v821 = vpop.permute.xlu0 %820
    %v822 = vsel %vm166, %v821, 0
    %824 = vmatpush.msra.mxu0 0.0
    %825 = vmatpush.msra.mxu0 0.0
    %826 = vmatpush.msra.mxu0 0.0
    %827 = vmatpush.msra.mxu0 0.0
    %828 = vmatpush.msra.mxu0 0.0
    %829 = vmatpush.msra.mxu0 0.0
    %830 = vmatpush.msra.mxu0 0.0
    %831 = vmatpush.msra.mxu0 0.0
    %832 = vmatpush.msra.mxu0 0.0
    %833 = vmatpush.msra.mxu0 0.0
    %834 = vmatpush.msra.mxu0 0.0
    %835 = vmatpush.msra.mxu0 0.0
    %836 = vmatpush.msra.mxu0 %v243
    %837 = vmatpush.msra.mxu0 %v242
    %838 = vmatpush.msra.mxu0 %v241
    %839 = vmatpush.msra.mxu0 %v240
    %840 = vmatmul.f32.gmra.mxu0 %v822
    %v841 = vpop.f32.mrf.mxu0
    %v842 = vadd.f32 0.0, %v841
    %843 = vdwg.mxu0
    %v844 = vadd.f32 %v221, %v757
    %v845 = vxor.u32 %v844, 2147483648
    %v846 = vmul.f32 %v845, 1.442695
    %v847 = vpow.pop %v846
    %v848 = vadd.f32 %v847, 1.0
    %v849 = vrcp.pop %v848
    %v850 = vmul.f32 %v848, %v849
    %v851 = vsub.f32 1.0, %v850
    %v852 = vmul.f32 %v849, %v851
    %v853 = vadd.f32 %v849, %v852
    %vm854 = vweird.f32 %v848
    %vm855 = vweird.f32 %v849
    %vm856 = vmor %vm854, %vm855
    %v857 = vsel %vm856, %v849, %v853
    %v858 = vand.u32 2147483647, %v848
    %vm859 = vcmp.eq.f32.partialorder %v858, 8.507059e+37
    %v860 = vand.u32 %v848, 2147483648
    %v861 = vor.u32 1.1754944e-38, %v860
    %v862 = vsel %vm859, %v861, %v857
    %v863 = vmul.f32 1.0, %v862
    %v864 = vmul.f32 %v863, 2.0
    %v865 = vsub.f32 %v864, 1.0
    %v866 = vmul.f32 %v863, %v727
    %868 = vrot.lane.b32.xlu0 %v865, 64
    %v869 = vpop.permute.xlu0 %868
    %v871 = vmul.f32 %v863, %v869
    %873 = vrot.lane.b32.xlu0 %v871, 32
    %v874 = vpop.permute.xlu0 %873
    %v876 = vadd.f32 %v866, %v874
    %v877 = vtanh.pop %v876
    %879 = vrot.lane.b32.xlu0 %v877, 64
    %v880 = vpop.permute.xlu0 %879
    %v882 = vmul.f32 %v863, %v880
    %884 = vrot.lane.b32.xlu0 %v882, 32
    %v885 = vpop.permute.xlu0 %884
    %v886 = vsel %vm166, %v885, 0
    %888 = vmatpush.msra.mxu0 0.0
    %889 = vmatpush.msra.mxu0 0.0
    %890 = vmatpush.msra.mxu0 0.0
    %891 = vmatpush.msra.mxu0 0.0
    %892 = vmatpush.msra.mxu0 0.0
    %893 = vmatpush.msra.mxu0 0.0
    %894 = vmatpush.msra.mxu0 0.0
    %895 = vmatpush.msra.mxu0 0.0
    %896 = vmatpush.msra.mxu0 0.0
    %897 = vmatpush.msra.mxu0 0.0
    %898 = vmatpush.msra.mxu0 0.0
    %899 = vmatpush.msra.mxu0 0.0
    %900 = vmatpush.msra.mxu0 %v238
    %901 = vmatpush.msra.mxu0 %v236
    %902 = vmatpush.msra.mxu0 %v234
    %903 = vmatpush.msra.mxu0 %v232
    %904 = vmatmul.f32.gmra.mxu0 %v886
    %v905 = vpop.f32.mrf.mxu0
    %v906 = vadd.f32 0.0, %v905
    %907 = vdwg.mxu0
    %908 = vmatpush.msra.mxu0 0.0
    %909 = vmatpush.msra.mxu0 0.0
    %910 = vmatpush.msra.mxu0 0.0
    %911 = vmatpush.msra.mxu0 0.0
    %912 = vmatpush.msra.mxu0 0.0
    %913 = vmatpush.msra.mxu0 0.0
    %914 = vmatpush.msra.mxu0 0.0
    %915 = vmatpush.msra.mxu0 0.0
    %916 = vmatpush.msra.mxu0 0.0
    %917 = vmatpush.msra.mxu0 0.0
    %918 = vmatpush.msra.mxu0 0.0
    %919 = vmatpush.msra.mxu0 0.0
    %920 = vmatpush.msra.mxu0 %v239
    %921 = vmatpush.msra.mxu0 %v237
    %922 = vmatpush.msra.mxu0 %v235
    %923 = vmatpush.msra.mxu0 %v233
    %924 = vmatmul.f32.gmra.mxu0 %v886
    %v925 = vpop.f32.mrf.mxu0
    %v926 = vadd.f32 0.0, %v925
    %927 = vdwg.mxu0
    %v928 = vadd.f32 %v926, %v842
    %v929 = vadd.f32 %v928, %v246
    %v930 = vxor.u32 %v929, 2147483648
    %v931 = vmul.f32 %v930, 1.442695
    %v932 = vpow.pop %v931
    %v933 = vadd.f32 %v932, 1.0
    %v934 = vrcp.pop %v933
    %v935 = vmul.f32 %v933, %v934
    %v936 = vsub.f32 1.0, %v935
    %v937 = vmul.f32 %v934, %v936
    %v938 = vadd.f32 %v934, %v937
    %vm939 = vweird.f32 %v933
    %vm940 = vweird.f32 %v934
    %vm941 = vmor %vm939, %vm940
    %v942 = vsel %vm941, %v934, %v938
    %v943 = vand.u32 2147483647, %v933
    %vm944 = vcmp.eq.f32.partialorder %v943, 8.507059e+37
    %v945 = vand.u32 %v933, 2147483648
    %v946 = vor.u32 1.1754944e-38, %v945
    %v947 = vsel %vm944, %v946, %v942
    %v948 = vmul.f32 1.0, %v947
    %v949 = vmul.f32 %v948, 2.0
    %v950 = vsub.f32 %v949, 1.0
    %v951 = vmul.f32 %v948, %v812
    %953 = vrot.lane.b32.xlu0 %v950, 64
    %v954 = vpop.permute.xlu0 %953
    %v956 = vmul.f32 %v948, %v954
    %958 = vrot.lane.b32.xlu0 %v956, 32
    %v959 = vpop.permute.xlu0 %958
    %v961 = vadd.f32 %v951, %v959
    %v962 = vtanh.pop %v961
    %964 = vrot.lane.b32.xlu0 %v962, 64
    %v965 = vpop.permute.xlu0 %964
    %v967 = vmul.f32 %v948, %v965
    %969 = vrot.lane.b32.xlu0 %v967, 32
    %v970 = vpop.permute.xlu0 %969
    %v971 = vsel %vm166, %v970, 0
    %973 = vmatpush.msra.mxu0 0.0
    %974 = vmatpush.msra.mxu0 0.0
    %975 = vmatpush.msra.mxu0 0.0
    %976 = vmatpush.msra.mxu0 0.0
    %977 = vmatpush.msra.mxu0 0.0
    %978 = vmatpush.msra.mxu0 0.0
    %979 = vmatpush.msra.mxu0 0.0
    %980 = vmatpush.msra.mxu0 0.0
    %981 = vmatpush.msra.mxu0 0.0
    %982 = vmatpush.msra.mxu0 0.0
    %983 = vmatpush.msra.mxu0 0.0
    %984 = vmatpush.msra.mxu0 0.0
    %985 = vmatpush.msra.mxu0 %v243
    %986 = vmatpush.msra.mxu0 %v242
    %987 = vmatpush.msra.mxu0 %v241
    %988 = vmatpush.msra.mxu0 %v240
    %989 = vmatmul.f32.gmra.mxu0 %v971
    %v990 = vpop.f32.mrf.mxu0
    %v991 = vadd.f32 0.0, %v990
    %992 = vdwg.mxu0
    %v993 = vadd.f32 %v224, %v906
    %v994 = vxor.u32 %v993, 2147483648
    %v995 = vmul.f32 %v994, 1.442695
    %v996 = vpow.pop %v995
    %v997 = vadd.f32 %v996, 1.0
    %v998 = vrcp.pop %v997
    %v999 = vmul.f32 %v997, %v998
    %v1000 = vsub.f32 1.0, %v999
    %v1001 = vmul.f32 %v998, %v1000
    %v1002 = vadd.f32 %v998, %v1001
    %vm1003 = vweird.f32 %v997
    %vm1004 = vweird.f32 %v998
    %vm1005 = vmor %vm1003, %vm1004
    %v1006 = vsel %vm1005, %v998, %v1002
    %v1007 = vand.u32 2147483647, %v997
    %vm1008 = vcmp.eq.f32.partialorder %v1007, 8.507059e+37
    %v1009 = vand.u32 %v997, 2147483648
    %v1010 = vor.u32 1.1754944e-38, %v1009
    %v1011 = vsel %vm1008, %v1010, %v1006
    %v1012 = vmul.f32 1.0, %v1011
    %v1013 = vmul.f32 %v1012, 2.0
    %v1014 = vsub.f32 %v1013, 1.0
    %v1015 = vmul.f32 %v1012, %v876
    %1017 = vrot.lane.b32.xlu0 %v1014, 64
    %v1018 = vpop.permute.xlu0 %1017
    %v1020 = vmul.f32 %v1012, %v1018
    %1022 = vrot.lane.b32.xlu0 %v1020, 32
    %v1023 = vpop.permute.xlu0 %1022
    %v1025 = vadd.f32 %v1015, %v1023
    %v1026 = vtanh.pop %v1025
    %1028 = vrot.lane.b32.xlu0 %v1026, 64
    %v1029 = vpop.permute.xlu0 %1028
    %v1031 = vmul.f32 %v1012, %v1029
    %1033 = vrot.lane.b32.xlu0 %v1031, 32
    %v1034 = vpop.permute.xlu0 %1033
    %v1035 = vsel %vm166, %v1034, 0
    %1037 = vmatpush.msra.mxu0 0.0
    %1038 = vmatpush.msra.mxu0 0.0
    %1039 = vmatpush.msra.mxu0 0.0
    %1040 = vmatpush.msra.mxu0 0.0
    %1041 = vmatpush.msra.mxu0 0.0
    %1042 = vmatpush.msra.mxu0 0.0
    %1043 = vmatpush.msra.mxu0 0.0
    %1044 = vmatpush.msra.mxu0 0.0
    %1045 = vmatpush.msra.mxu0 0.0
    %1046 = vmatpush.msra.mxu0 0.0
    %1047 = vmatpush.msra.mxu0 0.0
    %1048 = vmatpush.msra.mxu0 0.0
    %1049 = vmatpush.msra.mxu0 %v238
    %1050 = vmatpush.msra.mxu0 %v236
    %1051 = vmatpush.msra.mxu0 %v234
    %1052 = vmatpush.msra.mxu0 %v232
    %1053 = vmatmul.f32.gmra.mxu0 %v1035
    %v1054 = vpop.f32.mrf.mxu0
    %v1055 = vadd.f32 0.0, %v1054
    %1056 = vdwg.mxu0
    %1057 = vmatpush.msra.mxu0 0.0
    %1058 = vmatpush.msra.mxu0 0.0
    %1059 = vmatpush.msra.mxu0 0.0
    %1060 = vmatpush.msra.mxu0 0.0
    %1061 = vmatpush.msra.mxu0 0.0
    %1062 = vmatpush.msra.mxu0 0.0
    %1063 = vmatpush.msra.mxu0 0.0
    %1064 = vmatpush.msra.mxu0 0.0
    %1065 = vmatpush.msra.mxu0 0.0
    %1066 = vmatpush.msra.mxu0 0.0
    %1067 = vmatpush.msra.mxu0 0.0
    %1068 = vmatpush.msra.mxu0 0.0
    %1069 = vmatpush.msra.mxu0 %v239
    %1070 = vmatpush.msra.mxu0 %v237
    %1071 = vmatpush.msra.mxu0 %v235
    %1072 = vmatpush.msra.mxu0 %v233
    %1073 = vmatmul.f32.gmra.mxu0 %v1035
    %v1074 = vpop.f32.mrf.mxu0
    %v1075 = vadd.f32 0.0, %v1074
    %1076 = vdwg.mxu0
    %v1077 = vadd.f32 %v1075, %v991
    %v1078 = vadd.f32 %v1077, %v246
    %v1079 = vxor.u32 %v1078, 2147483648
    %v1080 = vmul.f32 %v1079, 1.442695
    %v1081 = vpow.pop %v1080
    %v1082 = vadd.f32 %v1081, 1.0
    %v1083 = vrcp.pop %v1082
    %v1084 = vmul.f32 %v1082, %v1083
    %v1085 = vsub.f32 1.0, %v1084
    %v1086 = vmul.f32 %v1083, %v1085
    %v1087 = vadd.f32 %v1083, %v1086
    %vm1088 = vweird.f32 %v1082
    %vm1089 = vweird.f32 %v1083
    %vm1090 = vmor %vm1088, %vm1089
    %v1091 = vsel %vm1090, %v1083, %v1087
    %v1092 = vand.u32 2147483647, %v1082
    %vm1093 = vcmp.eq.f32.partialorder %v1092, 8.507059e+37
    %v1094 = vand.u32 %v1082, 2147483648
    %v1095 = vor.u32 1.1754944e-38, %v1094
    %v1096 = vsel %vm1093, %v1095, %v1091
    %v1097 = vmul.f32 1.0, %v1096
    %v1098 = vmul.f32 %v1097, 2.0
    %v1099 = vsub.f32 %v1098, 1.0
    %v1100 = vmul.f32 %v1097, %v961
    %1102 = vrot.lane.b32.xlu0 %v1099, 64
    %v1103 = vpop.permute.xlu0 %1102
    %v1105 = vmul.f32 %v1097, %v1103
    %1107 = vrot.lane.b32.xlu0 %v1105, 32
    %v1108 = vpop.permute.xlu0 %1107
    %v1110 = vadd.f32 %v1100, %v1108
    %v1111 = vtanh.pop %v1110
    %1113 = vrot.lane.b32.xlu0 %v1111, 64
    %v1114 = vpop.permute.xlu0 %1113
    %v1116 = vmul.f32 %v1097, %v1114
    %1118 = vrot.lane.b32.xlu0 %v1116, 32
    %v1119 = vpop.permute.xlu0 %1118
    %v1120 = vsel %vm166, %v1119, 0
    %1122 = vmatpush.msra.mxu0 0.0
    %1123 = vmatpush.msra.mxu0 0.0
    %1124 = vmatpush.msra.mxu0 0.0
    %1125 = vmatpush.msra.mxu0 0.0
    %1126 = vmatpush.msra.mxu0 0.0
    %1127 = vmatpush.msra.mxu0 0.0
    %1128 = vmatpush.msra.mxu0 0.0
    %1129 = vmatpush.msra.mxu0 0.0
    %1130 = vmatpush.msra.mxu0 0.0
    %1131 = vmatpush.msra.mxu0 0.0
    %1132 = vmatpush.msra.mxu0 0.0
    %1133 = vmatpush.msra.mxu0 0.0
    %1134 = vmatpush.msra.mxu0 %v243
    %1135 = vmatpush.msra.mxu0 %v242
    %1136 = vmatpush.msra.mxu0 %v241
    %1137 = vmatpush.msra.mxu0 %v240
    %1138 = vmatmul.f32.gmra.mxu0 %v1120
    %v1139 = vpop.f32.mrf.mxu0
    %v1140 = vadd.f32 0.0, %v1139
    %1141 = vdwg.mxu0
    %v1142 = vadd.f32 %v227, %v1055
    %v1143 = vxor.u32 %v1142, 2147483648
    %v1144 = vmul.f32 %v1143, 1.442695
    %v1145 = vpow.pop %v1144
    %v1146 = vadd.f32 %v1145, 1.0
    %v1147 = vrcp.pop %v1146
    %v1148 = vmul.f32 %v1146, %v1147
    %v1149 = vsub.f32 1.0, %v1148
    %v1150 = vmul.f32 %v1147, %v1149
    %v1151 = vadd.f32 %v1147, %v1150
    %vm1152 = vweird.f32 %v1146
    %vm1153 = vweird.f32 %v1147
    %vm1154 = vmor %vm1152, %vm1153
    %v1155 = vsel %vm1154, %v1147, %v1151
    %v1156 = vand.u32 2147483647, %v1146
    %vm1157 = vcmp.eq.f32.partialorder %v1156, 8.507059e+37
    %v1158 = vand.u32 %v1146, 2147483648
    %v1159 = vor.u32 1.1754944e-38, %v1158
    %v1160 = vsel %vm1157, %v1159, %v1155
    %v1161 = vmul.f32 1.0, %v1160
    %v1162 = vmul.f32 %v1161, 2.0
    %v1163 = vsub.f32 %v1162, 1.0
    %v1164 = vmul.f32 %v1161, %v1025
    %1166 = vrot.lane.b32.xlu0 %v1163, 64
    %v1167 = vpop.permute.xlu0 %1166
    %v1169 = vmul.f32 %v1161, %v1167
    %1171 = vrot.lane.b32.xlu0 %v1169, 32
    %v1172 = vpop.permute.xlu0 %1171
    %v1174 = vadd.f32 %v1164, %v1172
    %v1175 = vtanh.pop %v1174
    %1177 = vrot.lane.b32.xlu0 %v1175, 64
    %v1178 = vpop.permute.xlu0 %1177
    %v1180 = vmul.f32 %v1161, %v1178
    %1182 = vrot.lane.b32.xlu0 %v1180, 32
    %v1183 = vpop.permute.xlu0 %1182
    %v1184 = vsel %vm166, %v1183, 0
    %1186 = vmatpush.msra.mxu0 0.0
    %1187 = vmatpush.msra.mxu0 0.0
    %1188 = vmatpush.msra.mxu0 0.0
    %1189 = vmatpush.msra.mxu0 0.0
    %1190 = vmatpush.msra.mxu0 0.0
    %1191 = vmatpush.msra.mxu0 0.0
    %1192 = vmatpush.msra.mxu0 0.0
    %1193 = vmatpush.msra.mxu0 0.0
    %1194 = vmatpush.msra.mxu0 0.0
    %1195 = vmatpush.msra.mxu0 0.0
    %1196 = vmatpush.msra.mxu0 0.0
    %1197 = vmatpush.msra.mxu0 0.0
    %1198 = vmatpush.msra.mxu0 %v238
    %1199 = vmatpush.msra.mxu0 %v236
    %1200 = vmatpush.msra.mxu0 %v234
    %1201 = vmatpush.msra.mxu0 %v232
    %1202 = vmatmul.f32.gmra.mxu0 %v1184
    %v1203 = vpop.f32.mrf.mxu0
    %v1204 = vadd.f32 0.0, %v1203
    %1205 = vdwg.mxu0
    %1206 = vmatpush.msra.mxu0 0.0
    %1207 = vmatpush.msra.mxu0 0.0
    %1208 = vmatpush.msra.mxu0 0.0
    %1209 = vmatpush.msra.mxu0 0.0
    %1210 = vmatpush.msra.mxu0 0.0
    %1211 = vmatpush.msra.mxu0 0.0
    %1212 = vmatpush.msra.mxu0 0.0
    %1213 = vmatpush.msra.mxu0 0.0
    %1214 = vmatpush.msra.mxu0 0.0
    %1215 = vmatpush.msra.mxu0 0.0
    %1216 = vmatpush.msra.mxu0 0.0
    %1217 = vmatpush.msra.mxu0 0.0
    %1218 = vmatpush.msra.mxu0 %v239
    %1219 = vmatpush.msra.mxu0 %v237
    %1220 = vmatpush.msra.mxu0 %v235
    %1221 = vmatpush.msra.mxu0 %v233
    %1222 = vmatmul.f32.gmra.mxu0 %v1184
    %v1223 = vpop.f32.mrf.mxu0
    %v1224 = vadd.f32 0.0, %v1223
    %1225 = vdwg.mxu0
    %v1226 = vadd.f32 %v1224, %v1140
    %v1227 = vadd.f32 %v1226, %v246
    %v1228 = vxor.u32 %v1227, 2147483648
    %v1229 = vmul.f32 %v1228, 1.442695
    %v1230 = vpow.pop %v1229
    %v1231 = vadd.f32 %v1230, 1.0
    %v1232 = vrcp.pop %v1231
    %v1233 = vmul.f32 %v1231, %v1232
    %v1234 = vsub.f32 1.0, %v1233
    %v1235 = vmul.f32 %v1232, %v1234
    %v1236 = vadd.f32 %v1232, %v1235
    %vm1237 = vweird.f32 %v1231
    %vm1238 = vweird.f32 %v1232
    %vm1239 = vmor %vm1237, %vm1238
    %v1240 = vsel %vm1239, %v1232, %v1236
    %v1241 = vand.u32 2147483647, %v1231
    %vm1242 = vcmp.eq.f32.partialorder %v1241, 8.507059e+37
    %v1243 = vand.u32 %v1231, 2147483648
    %v1244 = vor.u32 1.1754944e-38, %v1243
    %v1245 = vsel %vm1242, %v1244, %v1240
    %v1246 = vmul.f32 1.0, %v1245
    %v1247 = vmul.f32 %v1246, 2.0
    %v1248 = vsub.f32 %v1247, 1.0
    %v1249 = vmul.f32 %v1246, %v1110
    %1251 = vrot.lane.b32.xlu0 %v1248, 64
    %v1252 = vpop.permute.xlu0 %1251
    %v1254 = vmul.f32 %v1246, %v1252
    %1256 = vrot.lane.b32.xlu0 %v1254, 32
    %v1257 = vpop.permute.xlu0 %1256
    %v1259 = vadd.f32 %v1249, %v1257
    %v1260 = vtanh.pop %v1259
    %1262 = vrot.lane.b32.xlu0 %v1260, 64
    %v1263 = vpop.permute.xlu0 %1262
    %v1265 = vmul.f32 %v1246, %v1263
    %1267 = vrot.lane.b32.xlu0 %v1265, 32
    %v1268 = vpop.permute.xlu0 %1267
    %v1269 = vsel %vm166, %v1268, 0
    %1271 = vmatpush.msra.mxu0 0.0
    %1272 = vmatpush.msra.mxu0 0.0
    %1273 = vmatpush.msra.mxu0 0.0
    %1274 = vmatpush.msra.mxu0 0.0
    %1275 = vmatpush.msra.mxu0 0.0
    %1276 = vmatpush.msra.mxu0 0.0
    %1277 = vmatpush.msra.mxu0 0.0
    %1278 = vmatpush.msra.mxu0 0.0
    %1279 = vmatpush.msra.mxu0 0.0
    %1280 = vmatpush.msra.mxu0 0.0
    %1281 = vmatpush.msra.mxu0 0.0
    %1282 = vmatpush.msra.mxu0 0.0
    %1283 = vmatpush.msra.mxu0 %v243
    %1284 = vmatpush.msra.mxu0 %v242
    %1285 = vmatpush.msra.mxu0 %v241
    %1286 = vmatpush.msra.mxu0 %v240
    %1287 = vmatmul.f32.gmra.mxu0 %v1269
    %v1288 = vpop.f32.mrf.mxu0
    %v1289 = vadd.f32 0.0, %v1288
    %1290 = vdwg.mxu0
    %v1291 = vadd.f32 %v230, %v1204
    %v1292 = vxor.u32 %v1291, 2147483648
    %v1293 = vmul.f32 %v1292, 1.442695
    %v1294 = vpow.pop %v1293
    %v1295 = vadd.f32 %v1294, 1.0
    %v1296 = vrcp.pop %v1295
    %v1297 = vmul.f32 %v1295, %v1296
    %v1298 = vsub.f32 1.0, %v1297
    %v1299 = vmul.f32 %v1296, %v1298
    %v1300 = vadd.f32 %v1296, %v1299
    %vm1301 = vweird.f32 %v1295
    %vm1302 = vweird.f32 %v1296
    %vm1303 = vmor %vm1301, %vm1302
    %v1304 = vsel %vm1303, %v1296, %v1300
    %v1305 = vand.u32 2147483647, %v1295
    %vm1306 = vcmp.eq.f32.partialorder %v1305, 8.507059e+37
    %v1307 = vand.u32 %v1295, 2147483648
    %v1308 = vor.u32 1.1754944e-38, %v1307
    %v1309 = vsel %vm1306, %v1308, %v1304
    %v1310 = vmul.f32 1.0, %v1309
    %v1311 = vmul.f32 %v1310, 2.0
    %v1312 = vsub.f32 %v1311, 1.0
    %v1313 = vmul.f32 %v1310, %v1174
    %1315 = vrot.lane.b32.xlu0 %v1312, 64
    %v1316 = vpop.permute.xlu0 %1315
    %v1318 = vmul.f32 %v1310, %v1316
    %1320 = vrot.lane.b32.xlu0 %v1318, 32
    %v1321 = vpop.permute.xlu0 %1320
    %v1323 = vadd.f32 %v1313, %v1321
    %v1324 = vtanh.pop %v1323
    %1326 = vrot.lane.b32.xlu0 %v1324, 64
    %v1327 = vpop.permute.xlu0 %1326
    %v1329 = vmul.f32 %v1310, %v1327
    %1331 = vrot.lane.b32.xlu0 %v1329, 32
    %v1332 = vpop.permute.xlu0 %1331
    %v1333 = vsel %vm166, %v1332, 0
    %1335 = vmatpush.msra.mxu0 0.0
    %1336 = vmatpush.msra.mxu0 0.0
    %1337 = vmatpush.msra.mxu0 0.0
    %1338 = vmatpush.msra.mxu0 0.0
    %1339 = vmatpush.msra.mxu0 0.0
    %1340 = vmatpush.msra.mxu0 0.0
    %1341 = vmatpush.msra.mxu0 0.0
    %1342 = vmatpush.msra.mxu0 0.0
    %1343 = vmatpush.msra.mxu0 0.0
    %1344 = vmatpush.msra.mxu0 0.0
    %1345 = vmatpush.msra.mxu0 0.0
    %1346 = vmatpush.msra.mxu0 0.0
    %1347 = vmatpush.msra.mxu0 %v239
    %1348 = vmatpush.msra.mxu0 %v237
    %1349 = vmatpush.msra.mxu0 %v235
    %1350 = vmatpush.msra.mxu0 %v233
    %1351 = vmatmul.f32.gmra.mxu0 %v1333
    %v1352 = vpop.f32.mrf.mxu0
    %v1353 = vadd.f32 0.0, %v1352
    %1354 = vdwg.mxu0
    %v1355 = vadd.f32 %v1353, %v1289
    %v1356 = vadd.f32 %v1355, %v246
    %v1357 = vxor.u32 %v1356, 2147483648
    %v1358 = vmul.f32 %v1357, 1.442695
    %v1359 = vpow.pop %v1358
    %v1360 = vadd.f32 %v1359, 1.0
    %v1361 = vrcp.pop %v1360
    %v1362 = vmul.f32 %v1360, %v1361
    %v1363 = vsub.f32 1.0, %v1362
    %v1364 = vmul.f32 %v1361, %v1363
    %v1365 = vadd.f32 %v1361, %v1364
    %vm1366 = vweird.f32 %v1360
    %vm1367 = vweird.f32 %v1361
    %vm1368 = vmor %vm1366, %vm1367
    %v1369 = vsel %vm1368, %v1361, %v1365
    %v1370 = vand.u32 2147483647, %v1360
    %vm1371 = vcmp.eq.f32.partialorder %v1370, 8.507059e+37
    %v1372 = vand.u32 %v1360, 2147483648
    %v1373 = vor.u32 1.1754944e-38, %v1372
    %v1374 = vsel %vm1371, %v1373, %v1369
    %v1375 = vmul.f32 1.0, %v1374
    %v1376 = vmul.f32 %v1375, 2.0
    %v1377 = vsub.f32 %v1376, 1.0
    %v1378 = vmul.f32 %v1375, %v1259
    %1380 = vrot.lane.b32.xlu0 %v1377, 64
    %v1381 = vpop.permute.xlu0 %1380
    %v1383 = vmul.f32 %v1375, %v1381
    %1385 = vrot.lane.b32.xlu0 %v1383, 32
    %v1386 = vpop.permute.xlu0 %1385
    %v1388 = vadd.f32 %v1378, %v1386
    %v1389 = vtanh.pop %v1388
    %1391 = vrot.lane.b32.xlu0 %v1389, 64
    %v1392 = vpop.permute.xlu0 %1391
    %v1394 = vmul.f32 %v1375, %v1392
    %v1395 = vld [vmem:[%s8] sm:$0x1]
    %v1397 = vperm.slane %v1395, 0
    %1398 = vrot.lane.b32.xlu0 %v1397, 96
    %v1399 = vpop.permute.xlu0 %1398
    %v1401 = vmul.f32 %v1329, %v1399
    %1402 = vrot.lane.b32.xlu0 %v1397, 64
    %v1403 = vpop.permute.xlu0 %1402
    %v1405 = vmul.f32 %v1394, %v1403
    %v1406 = vadd.f32 %v1401, %v1405
    %1408 = vrot.lane.b32.xlu0 %v1406, 32
    %v1409 = vpop.permute.xlu0 %1408
    %v1411 = vsel %vm166, %v1409, 0.0
    %1412 = vadd.xlane.f32.xlu0 %v1411
    %v1413 = vpop.xlane.xlu0 %1412
    %v1414 = vld [vmem:[#allocation2] sm:$0x1]
    %v1416 = vperm.slane %v1414, 0
    %v1418 = vadd.f32 %v1413, %v1416
    %vm1419 = vcmask 7168
    %1420 = vst.msk [vmem:[%s10] sm:$0xff] %vm1419, %v1418
    // Predicated region
    $region50: #{lstm_model_forward.1} parent=1 // pred_check
      _
    $region51: #{lstm_model_forward.1} parent=1 // pred_check_branch
      %1422 = sbr.rel (0) target = $region53
    $region52: #{lstm_model_forward.1} parent=1 // pred_region
      _
    $region53: #{lstm_model_forward.1} parent=1 // pred_fallthru
      _
    // Predicated region
    $region54: #{lstm_model_forward.1} parent=1 // pred_check
      _
    $region55: #{lstm_model_forward.1} parent=1 // pred_check_branch
      %1424 = sbr.rel (0) target = $region57
    $region56: #{lstm_model_forward.1} parent=1 // pred_region
      _
    $region57: #{lstm_model_forward.1} parent=1 // pred_fallthru
      _
    %1425 = vsyncpa [#allocation4], 1
    %1426 = vsyncpa [#allocation6], 1

</llo_original>
